<compile_context>
chip_gen: v5e
topology: v5e:2x2
jax: 0.10.0
libtpu: 0.0.40
codegen_flags: <defaults>
</compile_context>

<pallas_src>
import functools

import jax
import jax.numpy as jnp
from jax.experimental import pallas as pl
from jax.experimental.pallas import tpu as pltpu

# Small synthetic hyper-parameters consistent with GTransformer.__init__
EMB = 32          # emb
HEADS = 4         # heads
DEPTH = 2         # depth
SEQ = 8           # seq_length
NUM_TOKENS = 64   # num_tokens
FF_MULT = 4       # ff_hidden_mult (TransformerBlock default)
LN_EPS = 1e-5

VOCAB_PAD = 128   # pad head vocab to a full 128-lane width (lane-dense stores)
NEG_BIG = -1e30   # finite mask value (avoids -inf - (-inf) = NaN hazards)


# ----------------------------------------------------------------------------
# Kernel
# ----------------------------------------------------------------------------
def _layernorm(x, gamma, beta):
    mu = jnp.mean(x, axis=-1, keepdims=True)
    xc = x - mu
    var = jnp.mean(xc * xc, axis=-1, keepdims=True)
    return xc * jax.lax.rsqrt(var + LN_EPS) * gamma + beta


def gtransformer_kernel(tok_ref,                        # SMEM: (batch*seq,) int32
                        tok_emb_ref, pos_emb_ref,       # VMEM embeddings
                        wqkv_ref, wu_ref, bu_ref, g1_ref, b1_ref,
                        w1_ref, bb1_ref, w2_ref, bb2_ref, g2_ref, b2_ref,
                        wout_ref, bout_ref,
                        o_ref,
                        x_scratch,
                        *, depth, heads, seq):
    """One batch element per grid step: embeddings + depth blocks + head."""
    b_idx = pl.program_id(0)
    e = tok_emb_ref.shape[1]
    s = e // heads

    # ---- fused embedding gather (SMEM token ids -> VMEM rows) + positions ----
    for i in range(seq):                                # static loop, seq == 8
        tok = tok_ref[b_idx * seq + i]
        x_scratch[pl.ds(i, 1), :] = tok_emb_ref[pl.ds(tok, 1), :]
    x = x_scratch[...] + pos_emb_ref[...]               # (t, e) f32 residual

    # ---- causal additive bias, built once (not per head / per block) ----
    rows = jax.lax.broadcasted_iota(jnp.int32, (seq, seq), 0)
    cols = jax.lax.broadcasted_iota(jnp.int32, (seq, seq), 1)
    causal_bias = jnp.where(cols > rows, NEG_BIG, 0.0).astype(jnp.float32)
    causal_bias = causal_bias[None, :, :]               # (1, t, t)

    # TODO(synk): convert to lax.fori_loop with dynamic ref indexing if depth
    # ever grows past 2 (static unrolling does not bound vreg live ranges).
    for d in range(depth):
        xb = x.astype(jnp.bfloat16)

        # fused QKV projection; q/k scale already folded into the weights.
        qkv = jnp.dot(xb, wqkv_ref[d],
                      preferred_element_type=jnp.float32).astype(jnp.bfloat16)

        def heads_view(base):                           # (t, e) lanes -> (h, t, s)
            return jnp.concatenate(
                [qkv[:, base + hh * s: base + (hh + 1) * s].reshape(1, seq, s)
                 for hh in range(heads)], axis=0)

        q = heads_view(0 * e)                           # (h, t, s) bf16
        k = heads_view(1 * e)
        v = heads_view(2 * e)

        # head-batched scores + single causal-bias add + one softmax pass
        dot = jnp.einsum('hts,hks->htk', q, k,
                         preferred_element_type=jnp.float32)   # (h, t, t)
        dot = dot + causal_bias
        dot = dot - jnp.max(dot, axis=-1, keepdims=True)
        p = jnp.exp(dot)
        p = p * pl.reciprocal(jnp.sum(p, axis=-1, keepdims=True), approx=True)

        ctx = jnp.einsum('htk,hks->hts', p.astype(jnp.bfloat16), v,
                         preferred_element_type=jnp.float32)   # (h, t, s)

        # unify: one batched dot over heads, then reduce over the head axis
        attn = jnp.einsum('hts,hse->hte', ctx.astype(jnp.bfloat16), wu_ref[d],
                          preferred_element_type=jnp.float32)  # (h, t, e)
        attn = jnp.sum(attn, axis=0) + bu_ref[d]               # (t, e)

        # --- residual + norm1 (f32) ---
        x1 = _layernorm(attn + x, g1_ref[d], b1_ref[d])

        # --- feed-forward (Linear -> ReLU -> Linear) ---
        h1 = jnp.dot(x1.astype(jnp.bfloat16), w1_ref[d],
                     preferred_element_type=jnp.float32) + bb1_ref[d]
        h1 = jnp.maximum(h1, 0.0)
        ff = jnp.dot(h1.astype(jnp.bfloat16), w2_ref[d],
                     preferred_element_type=jnp.float32) + bb2_ref[d]

        # --- residual + norm2 (dropout p=0 -> identity) ---
        x = _layernorm(ff + x1, g2_ref[d], b2_ref[d])

    # --- head: toprobs Linear (vocab padded to 128 lanes) + log_softmax ---
    logits = jnp.dot(x.astype(jnp.bfloat16), wout_ref[...],
                     preferred_element_type=jnp.float32) + bout_ref[...]
    z = logits - jnp.max(logits, axis=-1, keepdims=True)
    lse = jnp.log(jnp.sum(jnp.exp(z), axis=-1, keepdims=True))
    o_ref[...] = z - lse                                # (t, VOCAB_PAD) lane-dense


# ----------------------------------------------------------------------------
# Wrappers
# ----------------------------------------------------------------------------
_PARAM_NAMES = ('wqkv', 'wu', 'bu', 'g1', 'b1', 'w1', 'bb1', 'w2', 'bb2',
                'g2', 'b2', 'wout', 'bout')


def prepare_params(params):
    """Stack per-block params along depth, fuse QKV (with the q/k scale folded
    in), reshape the unify weight to per-head form, cast matmul weights to
    bf16, and pad the head to a 128-lane vocab."""
    blocks = params['blocks']
    stk = lambda name: jnp.stack([blk[name] for blk in blocks], axis=0)
    qk_scale = float(EMB) ** (-0.25)
    wqkv = jnp.concatenate([stk('wq') * qk_scale,
                            stk('wk') * qk_scale,
                            stk('wv')], axis=-1)                # (D, E, 3E)
    prepped = dict(
        wqkv=wqkv.astype(jnp.bfloat16),
        # unify weight as (D, H, S, E) so the kernel can do a batched per-head dot
        wu=stk('wu').reshape(DEPTH, HEADS, EMB // HEADS, EMB).astype(jnp.bfloat16),
        bu=stk('bu'),
        g1=stk('g1'), b1=stk('b1'),
        w1=stk('w1').astype(jnp.bfloat16), bb1=stk('bb1'),
        w2=stk('w2').astype(jnp.bfloat16), bb2=stk('bb2'),
        g2=stk('g2'), b2=stk('b2'),
    )
    wout = jnp.zeros((EMB, VOCAB_PAD), jnp.float32)
    wout = wout.at[:, :NUM_TOKENS].set(params['w_out'])
    # bout must stay f32: NEG_BIG overflows bf16 to -inf (NaN hazard in log_softmax).
    bout = jnp.full((1, VOCAB_PAD), NEG_BIG, jnp.float32)
    bout = bout.at[:, :NUM_TOKENS].set(params['b_out'][0])
    prepped['wout'] = wout.astype(jnp.bfloat16)
    prepped['bout'] = bout
    return prepped


def run_gtransformer(tokens_flat, tok_emb, pos_emb, prepped, *, batch, seq):
    args = [prepped[n] for n in _PARAM_NAMES]
    kernel = functools.partial(gtransformer_kernel, depth=DEPTH, heads=HEADS,
                               seq=seq)
    # Constant operands: whole-array VMEM residency, no double-buffering.
    vmem_spec = pl.BlockSpec(memory_space=pltpu.MemorySpace.VMEM)

    grid_spec = pltpu.PrefetchScalarGridSpec(
        num_scalar_prefetch=1,                  # tokens -> SMEM
        grid=(batch,),                          # one batch element per step
        in_specs=[vmem_spec, vmem_spec] + [vmem_spec] * len(args),
        out_specs=pl.BlockSpec((seq, VOCAB_PAD), lambda b, tok: (b, 0)),
        scratch_shapes=[pltpu.VMEM((seq, EMB), jnp.float32)],
    )
    return pl.pallas_call(
        kernel,
        out_shape=jax.ShapeDtypeStruct((batch * seq, VOCAB_PAD), jnp.float32),
        grid_spec=grid_spec,
        compiler_params=pltpu.CompilerParams(
            dimension_semantics=("parallel",)),  # second TC on v7x; serial on v5e/v6e
    )(tokens_flat, tok_emb, pos_emb, *args)


def gtransformer_forward(tokens_idx, params, prepped=None):
    if prepped is None:
        prepped = prepare_params(params)
    b, t = tokens_idx.shape
    out = run_gtransformer(tokens_idx.reshape(b * t).astype(jnp.int32),
                           params['tok_emb'], params['pos_emb'][:t],
                           prepped, batch=b, seq=t)
    return out.reshape(b, t, VOCAB_PAD)[:, :, :NUM_TOKENS]


# ----------------------------------------------------------------------------
# Deterministic parameter init + pure-JAX (f32) reference
# ----------------------------------------------------------------------------
def init_params(key):
    scale = 0.02
    keys = jax.random.split(key, 3 + DEPTH)
    hid = FF_MULT * EMB
    params = {
        'tok_emb': scale * jax.random.normal(keys[0], (NUM_TOKENS, EMB), jnp.float32),
        'pos_emb': scale * jax.random.normal(keys[1], (SEQ, EMB), jnp.float32),
        'w_out':   scale * jax.random.normal(keys[2], (EMB, NUM_TOKENS), jnp.float32),
        'b_out':   jnp.zeros((1, NUM_TOKENS), jnp.float32),
        'blocks': [],
    }
    for d in range(DEPTH):
        bk = jax.random.split(keys[3 + d], 6)
        params['blocks'].append(dict(
            wq=scale * jax.random.normal(bk[0], (EMB, EMB), jnp.float32),
            wk=scale * jax.random.normal(bk[1], (EMB, EMB), jnp.float32),
            wv=scale * jax.random.normal(bk[2], (EMB, EMB), jnp.float32),
            wu=scale * jax.random.normal(bk[3], (EMB, EMB), jnp.float32),
            bu=jnp.zeros((1, EMB), jnp.float32),
            g1=jnp.ones((1, EMB), jnp.float32),
            b1=jnp.zeros((1, EMB), jnp.float32),
            w1=scale * jax.random.normal(bk[4], (EMB, hid), jnp.float32),
            bb1=jnp.zeros((1, hid), jnp.float32),
            w2=scale * jax.random.normal(bk[5], (hid, EMB), jnp.float32),
            bb2=jnp.zeros((1, EMB), jnp.float32),
            g2=jnp.ones((1, EMB), jnp.float32),
            b2=jnp.zeros((1, EMB), jnp.float32),
        ))
    return params


def _ref_layernorm(x, g, b):
    mu = jnp.mean(x, axis=-1, keepdims=True)
    var = jnp.mean((x - mu) ** 2, axis=-1, keepdims=True)
    return (x - mu) * jax.lax.rsqrt(var + LN_EPS) * g + b


def ref_block(x, p):
    b, t, e = x.shape
    h, s = HEADS, EMB // HEADS
    q, k, v = x @ p['wq'], x @ p['wk'], x @ p['wv']
    sc = e ** (-0.25)
    q = (q * sc).reshape(b, t, h, s).transpose(0, 2, 1, 3)
    k = (k * sc).reshape(b, t, h, s).transpose(0, 2, 1, 3)
    v = v.reshape(b, t, h, s).transpose(0, 2, 1, 3)
    dot = jnp.einsum('bhts,bhks->bhtk', q, k)
    mask = jnp.triu(jnp.ones((t, t), bool), k=1)
    dot = jnp.where(mask, -jnp.inf, dot)
    a = jax.nn.softmax(dot, axis=-1)
    out = jnp.einsum('bhtk,bhks->bhts', a, v).transpose(0, 2, 1, 3).reshape(b, t, e)
    out = out @ p['wu'] + p['bu'][0]
    x1 = _ref_layernorm(out + x, p['g1'][0], p['b1'][0])
    ff = jnp.maximum(x1 @ p['w1'] + p['bb1'][0], 0.0) @ p['w2'] + p['bb2'][0]
    return _ref_layernorm(ff + x1, p['g2'][0], p['b2'][0])


def ref_forward(tokens_idx, params):
    b, t = tokens_idx.shape
    x = params['tok_emb'][tokens_idx] + params['pos_emb'][jnp.arange(t)][None, :, :]
    for p in params['blocks']:
        x = ref_block(x, p)
    logits = x @ params['w_out'] + params['b_out'][0]
    return jax.nn.log_softmax(logits, axis=-1)


# ----------------------------------------------------------------------------
if __name__ == "__main__":
    key = jax.random.PRNGKey(0)
    pkey, xkey = jax.random.split(key)
    params = init_params(pkey)
    prepped = prepare_params(params)

    batch = 2
    x = jax.random.randint(xkey, (batch, SEQ), 0, NUM_TOKENS, dtype=jnp.int32)

    out = gtransformer_forward(x, params, prepped)
    out = jax.block_until_ready(out)

    ref = ref_forward(x, params)
    assert out.shape == (batch, SEQ, NUM_TOKENS), out.shape
    assert bool(jnp.all(jnp.isfinite(out)))
    # bf16 matmul operands (f32 accumulation) + approx reciprocal -> relaxed tol.
    assert bool(jnp.allclose(out, ref, rtol=2e-3, atol=2e-3)), \
        float(jnp.max(jnp.abs(out - ref)))

    print("KERNEL_OK")
</pallas_src>

<mosaic_0001>
module attributes {stable_mosaic.version = 11 : i64} {
  func.func @gtransformer_kernel(%arg0: i32, %arg1: memref<16xi32, #tpu.memory_space<smem>>, %arg2: memref<64x32xf32, #tpu.memory_space<vmem>>, %arg3: memref<8x32xf32, #tpu.memory_space<vmem>>, %arg4: memref<2x32x96xbf16, #tpu.memory_space<vmem>>, %arg5: memref<2x4x8x32xbf16, #tpu.memory_space<vmem>>, %arg6: memref<2x1x32xf32, #tpu.memory_space<vmem>>, %arg7: memref<2x1x32xf32, #tpu.memory_space<vmem>>, %arg8: memref<2x1x32xf32, #tpu.memory_space<vmem>>, %arg9: memref<2x32x128xbf16, #tpu.memory_space<vmem>>, %arg10: memref<2x1x128xf32, #tpu.memory_space<vmem>>, %arg11: memref<2x128x32xbf16, #tpu.memory_space<vmem>>, %arg12: memref<2x1x32xf32, #tpu.memory_space<vmem>>, %arg13: memref<2x1x32xf32, #tpu.memory_space<vmem>>, %arg14: memref<2x1x32xf32, #tpu.memory_space<vmem>>, %arg15: memref<32x128xbf16, #tpu.memory_space<vmem>>, %arg16: memref<1x128xf32, #tpu.memory_space<vmem>>, %arg17: memref<8x128xf32, #tpu.memory_space<vmem>>, %arg18: memref<8x32xf32, #tpu.memory_space<vmem>>) attributes {dimension_semantics = [#tpu.dimension_semantics<parallel>], iteration_bounds = array<i64: 2>, scalar_prefetch = 1 : i64, scratch_operands = 1 : i64, tpu.core_type = #tpu.core_type<tc>, window_params = [{pipeline_mode = #tpu.pipeline_mode<synchronous>, transform_indices = @transform_0, window_bounds = array<i64: 64, 32>}, {pipeline_mode = #tpu.pipeline_mode<synchronous>, transform_indices = @transform_1, window_bounds = array<i64: 8, 32>}, {pipeline_mode = #tpu.pipeline_mode<synchronous>, transform_indices = @transform_2, window_bounds = array<i64: 2, 32, 96>}, {pipeline_mode = #tpu.pipeline_mode<synchronous>, transform_indices = @transform_3, window_bounds = array<i64: 2, 4, 8, 32>}, {pipeline_mode = #tpu.pipeline_mode<synchronous>, transform_indices = @transform_4, window_bounds = array<i64: 2, 1, 32>}, {pipeline_mode = #tpu.pipeline_mode<synchronous>, transform_indices = @transform_5, window_bounds = array<i64: 2, 1, 32>}, {pipeline_mode = #tpu.pipeline_mode<synchronous>, transform_indices = @transform_6, window_bounds = array<i64: 2, 1, 32>}, {pipeline_mode = #tpu.pipeline_mode<synchronous>, transform_indices = @transform_7, window_bounds = array<i64: 2, 32, 128>}, {pipeline_mode = #tpu.pipeline_mode<synchronous>, transform_indices = @transform_8, window_bounds = array<i64: 2, 1, 128>}, {pipeline_mode = #tpu.pipeline_mode<synchronous>, transform_indices = @transform_9, window_bounds = array<i64: 2, 128, 32>}, {pipeline_mode = #tpu.pipeline_mode<synchronous>, transform_indices = @transform_10, window_bounds = array<i64: 2, 1, 32>}, {pipeline_mode = #tpu.pipeline_mode<synchronous>, transform_indices = @transform_11, window_bounds = array<i64: 2, 1, 32>}, {pipeline_mode = #tpu.pipeline_mode<synchronous>, transform_indices = @transform_12, window_bounds = array<i64: 2, 1, 32>}, {pipeline_mode = #tpu.pipeline_mode<synchronous>, transform_indices = @transform_13, window_bounds = array<i64: 32, 128>}, {pipeline_mode = #tpu.pipeline_mode<synchronous>, transform_indices = @transform_14, window_bounds = array<i64: 1, 128>}, {transform_indices = @transform_15, window_bounds = array<i64: 8, 128>}]} {
    %c8_i32 = arith.constant 8 : i32
    %0 = arith.muli %arg0, %c8_i32 : i32
    %c0_i32 = arith.constant 0 : i32
    %1 = arith.addi %0, %c0_i32 : i32
    %2 = arith.index_cast %1 : i32 to index
    %3 = memref.load %arg1[%2] : memref<16xi32, #tpu.memory_space<smem>>
    %4 = arith.index_cast %3 : i32 to index
    %c0 = arith.constant 0 : index
    %5 = vector.load %arg2[%4, %c0] : memref<64x32xf32, #tpu.memory_space<vmem>>, vector<1x32xf32>
    %c0_0 = arith.constant 0 : index
    %c0_1 = arith.constant 0 : index
    %6 = vector.load %arg18[%c0_0, %c0_1] : memref<8x32xf32, #tpu.memory_space<vmem>>, vector<1x32xf32>
    tpu.vector_store %arg18[%c0_0, %c0_1], %5 {strides = array<i32>} : memref<8x32xf32, #tpu.memory_space<vmem>>, vector<1x32xf32>,
    %c8_i32_2 = arith.constant 8 : i32
    %7 = arith.muli %arg0, %c8_i32_2 : i32
    %c1_i32 = arith.constant 1 : i32
    %8 = arith.addi %7, %c1_i32 : i32
    %9 = arith.index_cast %8 : i32 to index
    %10 = memref.load %arg1[%9] : memref<16xi32, #tpu.memory_space<smem>>
    %11 = arith.index_cast %10 : i32 to index
    %c0_3 = arith.constant 0 : index
    %12 = vector.load %arg2[%11, %c0_3] : memref<64x32xf32, #tpu.memory_space<vmem>>, vector<1x32xf32>
    %c1 = arith.constant 1 : index
    %c0_4 = arith.constant 0 : index
    %13 = vector.load %arg18[%c1, %c0_4] : memref<8x32xf32, #tpu.memory_space<vmem>>, vector<1x32xf32>
    tpu.vector_store %arg18[%c1, %c0_4], %12 {strides = array<i32>} : memref<8x32xf32, #tpu.memory_space<vmem>>, vector<1x32xf32>,
    %c8_i32_5 = arith.constant 8 : i32
    %14 = arith.muli %arg0, %c8_i32_5 : i32
    %c2_i32 = arith.constant 2 : i32
    %15 = arith.addi %14, %c2_i32 : i32
    %16 = arith.index_cast %15 : i32 to index
    %17 = memref.load %arg1[%16] : memref<16xi32, #tpu.memory_space<smem>>
    %18 = arith.index_cast %17 : i32 to index
    %c0_6 = arith.constant 0 : index
    %19 = vector.load %arg2[%18, %c0_6] : memref<64x32xf32, #tpu.memory_space<vmem>>, vector<1x32xf32>
    %c2 = arith.constant 2 : index
    %c0_7 = arith.constant 0 : index
    %20 = vector.load %arg18[%c2, %c0_7] : memref<8x32xf32, #tpu.memory_space<vmem>>, vector<1x32xf32>
    tpu.vector_store %arg18[%c2, %c0_7], %19 {strides = array<i32>} : memref<8x32xf32, #tpu.memory_space<vmem>>, vector<1x32xf32>,
    %c8_i32_8 = arith.constant 8 : i32
    %21 = arith.muli %arg0, %c8_i32_8 : i32
    %c3_i32 = arith.constant 3 : i32
    %22 = arith.addi %21, %c3_i32 : i32
    %23 = arith.index_cast %22 : i32 to index
    %24 = memref.load %arg1[%23] : memref<16xi32, #tpu.memory_space<smem>>
    %25 = arith.index_cast %24 : i32 to index
    %c0_9 = arith.constant 0 : index
    %26 = vector.load %arg2[%25, %c0_9] : memref<64x32xf32, #tpu.memory_space<vmem>>, vector<1x32xf32>
    %c3 = arith.constant 3 : index
    %c0_10 = arith.constant 0 : index
    %27 = vector.load %arg18[%c3, %c0_10] : memref<8x32xf32, #tpu.memory_space<vmem>>, vector<1x32xf32>
    tpu.vector_store %arg18[%c3, %c0_10], %26 {strides = array<i32>} : memref<8x32xf32, #tpu.memory_space<vmem>>, vector<1x32xf32>,
    %c8_i32_11 = arith.constant 8 : i32
    %28 = arith.muli %arg0, %c8_i32_11 : i32
    %c4_i32 = arith.constant 4 : i32
    %29 = arith.addi %28, %c4_i32 : i32
    %30 = arith.index_cast %29 : i32 to index
    %31 = memref.load %arg1[%30] : memref<16xi32, #tpu.memory_space<smem>>
    %32 = arith.index_cast %31 : i32 to index
    %c0_12 = arith.constant 0 : index
    %33 = vector.load %arg2[%32, %c0_12] : memref<64x32xf32, #tpu.memory_space<vmem>>, vector<1x32xf32>
    %c4 = arith.constant 4 : index
    %c0_13 = arith.constant 0 : index
    %34 = vector.load %arg18[%c4, %c0_13] : memref<8x32xf32, #tpu.memory_space<vmem>>, vector<1x32xf32>
    tpu.vector_store %arg18[%c4, %c0_13], %33 {strides = array<i32>} : memref<8x32xf32, #tpu.memory_space<vmem>>, vector<1x32xf32>,
    %c8_i32_14 = arith.constant 8 : i32
    %35 = arith.muli %arg0, %c8_i32_14 : i32
    %c5_i32 = arith.constant 5 : i32
    %36 = arith.addi %35, %c5_i32 : i32
    %37 = arith.index_cast %36 : i32 to index
    %38 = memref.load %arg1[%37] : memref<16xi32, #tpu.memory_space<smem>>
    %39 = arith.index_cast %38 : i32 to index
    %c0_15 = arith.constant 0 : index
    %40 = vector.load %arg2[%39, %c0_15] : memref<64x32xf32, #tpu.memory_space<vmem>>, vector<1x32xf32>
    %c5 = arith.constant 5 : index
    %c0_16 = arith.constant 0 : index
    %41 = vector.load %arg18[%c5, %c0_16] : memref<8x32xf32, #tpu.memory_space<vmem>>, vector<1x32xf32>
    tpu.vector_store %arg18[%c5, %c0_16], %40 {strides = array<i32>} : memref<8x32xf32, #tpu.memory_space<vmem>>, vector<1x32xf32>,
    %c8_i32_17 = arith.constant 8 : i32
    %42 = arith.muli %arg0, %c8_i32_17 : i32
    %c6_i32 = arith.constant 6 : i32
    %43 = arith.addi %42, %c6_i32 : i32
    %44 = arith.index_cast %43 : i32 to index
    %45 = memref.load %arg1[%44] : memref<16xi32, #tpu.memory_space<smem>>
    %46 = arith.index_cast %45 : i32 to index
    %c0_18 = arith.constant 0 : index
    %47 = vector.load %arg2[%46, %c0_18] : memref<64x32xf32, #tpu.memory_space<vmem>>, vector<1x32xf32>
    %c6 = arith.constant 6 : index
    %c0_19 = arith.constant 0 : index
    %48 = vector.load %arg18[%c6, %c0_19] : memref<8x32xf32, #tpu.memory_space<vmem>>, vector<1x32xf32>
    tpu.vector_store %arg18[%c6, %c0_19], %47 {strides = array<i32>} : memref<8x32xf32, #tpu.memory_space<vmem>>, vector<1x32xf32>,
    %c8_i32_20 = arith.constant 8 : i32
    %49 = arith.muli %arg0, %c8_i32_20 : i32
    %c7_i32 = arith.constant 7 : i32
    %50 = arith.addi %49, %c7_i32 : i32
    %51 = arith.index_cast %50 : i32 to index
    %52 = memref.load %arg1[%51] : memref<16xi32, #tpu.memory_space<smem>>
    %53 = arith.index_cast %52 : i32 to index
    %c0_21 = arith.constant 0 : index
    %54 = vector.load %arg2[%53, %c0_21] : memref<64x32xf32, #tpu.memory_space<vmem>>, vector<1x32xf32>
    %c7 = arith.constant 7 : index
    %c0_22 = arith.constant 0 : index
    %55 = vector.load %arg18[%c7, %c0_22] : memref<8x32xf32, #tpu.memory_space<vmem>>, vector<1x32xf32>
    tpu.vector_store %arg18[%c7, %c0_22], %54 {strides = array<i32>} : memref<8x32xf32, #tpu.memory_space<vmem>>, vector<1x32xf32>,
    %c0_23 = arith.constant 0 : index
    %c0_24 = arith.constant 0 : index
    %56 = vector.load %arg18[%c0_23, %c0_24] : memref<8x32xf32, #tpu.memory_space<vmem>>, vector<8x32xf32>
    %c0_25 = arith.constant 0 : index
    %c0_26 = arith.constant 0 : index
    %57 = vector.load %arg3[%c0_25, %c0_26] : memref<8x32xf32, #tpu.memory_space<vmem>>, vector<8x32xf32>
    %58 = arith.addf %56, %57 : vector<8x32xf32>
    %59 = tpu.iota {dimensions = array<i32: 0>} : vector<8x8xi32>
    %60 = tpu.iota {dimensions = array<i32: 1>} : vector<8x8xi32>
    %61 = arith.cmpi sgt, %60, %59 : vector<8x8xi32>
    %cst = arith.constant -1.000000e+30 : f32
    %cst_27 = arith.constant 0.000000e+00 : f32
    %62 = vector.broadcast %cst : f32 to vector<8x8xf32>
    %63 = vector.broadcast %cst_27 : f32 to vector<8x8xf32>
    %64 = arith.select %61, %62, %63 : vector<8x8xi1>, vector<8x8xf32>
    %65 = vector.shape_cast %64 : vector<8x8xf32> to vector<1x8x8xf32>
    %66 = arith.truncf %58 : vector<8x32xf32> to vector<8x32xbf16>
    %c0_28 = arith.constant 0 : index
    %c0_29 = arith.constant 0 : index
    %c0_30 = arith.constant 0 : index
    %67 = vector.load %arg4[%c0_28, %c0_29, %c0_30] : memref<2x32x96xbf16, #tpu.memory_space<vmem>>, vector<1x32x96xbf16>
    %68 = vector.shape_cast %67 : vector<1x32x96xbf16> to vector<32x96xbf16>
    %cst_31 = arith.constant dense<0.000000e+00> : vector<8x96xf32>
    %69 = tpu.matmul %66, %68, %cst_31 {dimension_numbers = #tpu.dot_dimension_numbers<[1], [0], [0], [1], [0, 0, 1, 1], [], []>} : vector<8x32xbf16>, vector<32x96xbf16>, vector<8x96xf32> -> vector<8x96xf32>
    %70 = arith.truncf %69 : vector<8x96xf32> to vector<8x96xbf16>
    %71 = vector.extract_strided_slice %70 {offsets = [0, 0], sizes = [8, 8], strides = [1, 1]} : vector<8x96xbf16> to vector<8x8xbf16>
    %72 = vector.shape_cast %71 : vector<8x8xbf16> to vector<1x8x8xbf16>
    %73 = vector.extract_strided_slice %70 {offsets = [0, 8], sizes = [8, 8], strides = [1, 1]} : vector<8x96xbf16> to vector<8x8xbf16>
    %74 = vector.shape_cast %73 : vector<8x8xbf16> to vector<1x8x8xbf16>
    %75 = vector.extract_strided_slice %70 {offsets = [0, 16], sizes = [8, 8], strides = [1, 1]} : vector<8x96xbf16> to vector<8x8xbf16>
    %76 = vector.shape_cast %75 : vector<8x8xbf16> to vector<1x8x8xbf16>
    %77 = vector.extract_strided_slice %70 {offsets = [0, 24], sizes = [8, 8], strides = [1, 1]} : vector<8x96xbf16> to vector<8x8xbf16>
    %78 = vector.shape_cast %77 : vector<8x8xbf16> to vector<1x8x8xbf16>
    %79 = tpu.concatenate %72, %74, %76, %78 in 0 : vector<1x8x8xbf16>, vector<1x8x8xbf16>, vector<1x8x8xbf16>, vector<1x8x8xbf16> -> vector<4x8x8xbf16>
    %80 = vector.extract_strided_slice %70 {offsets = [0, 32], sizes = [8, 8], strides = [1, 1]} : vector<8x96xbf16> to vector<8x8xbf16>
    %81 = vector.shape_cast %80 : vector<8x8xbf16> to vector<1x8x8xbf16>
    %82 = vector.extract_strided_slice %70 {offsets = [0, 40], sizes = [8, 8], strides = [1, 1]} : vector<8x96xbf16> to vector<8x8xbf16>
    %83 = vector.shape_cast %82 : vector<8x8xbf16> to vector<1x8x8xbf16>
    %84 = vector.extract_strided_slice %70 {offsets = [0, 48], sizes = [8, 8], strides = [1, 1]} : vector<8x96xbf16> to vector<8x8xbf16>
    %85 = vector.shape_cast %84 : vector<8x8xbf16> to vector<1x8x8xbf16>
    %86 = vector.extract_strided_slice %70 {offsets = [0, 56], sizes = [8, 8], strides = [1, 1]} : vector<8x96xbf16> to vector<8x8xbf16>
    %87 = vector.shape_cast %86 : vector<8x8xbf16> to vector<1x8x8xbf16>
    %88 = tpu.concatenate %81, %83, %85, %87 in 0 : vector<1x8x8xbf16>, vector<1x8x8xbf16>, vector<1x8x8xbf16>, vector<1x8x8xbf16> -> vector<4x8x8xbf16>
    %89 = vector.extract_strided_slice %70 {offsets = [0, 64], sizes = [8, 8], strides = [1, 1]} : vector<8x96xbf16> to vector<8x8xbf16>
    %90 = vector.shape_cast %89 : vector<8x8xbf16> to vector<1x8x8xbf16>
    %91 = vector.extract_strided_slice %70 {offsets = [0, 72], sizes = [8, 8], strides = [1, 1]} : vector<8x96xbf16> to vector<8x8xbf16>
    %92 = vector.shape_cast %91 : vector<8x8xbf16> to vector<1x8x8xbf16>
    %93 = vector.extract_strided_slice %70 {offsets = [0, 80], sizes = [8, 8], strides = [1, 1]} : vector<8x96xbf16> to vector<8x8xbf16>
    %94 = vector.shape_cast %93 : vector<8x8xbf16> to vector<1x8x8xbf16>
    %95 = vector.extract_strided_slice %70 {offsets = [0, 88], sizes = [8, 8], strides = [1, 1]} : vector<8x96xbf16> to vector<8x8xbf16>
    %96 = vector.shape_cast %95 : vector<8x8xbf16> to vector<1x8x8xbf16>
    %97 = tpu.concatenate %90, %92, %94, %96 in 0 : vector<1x8x8xbf16>, vector<1x8x8xbf16>, vector<1x8x8xbf16>, vector<1x8x8xbf16> -> vector<4x8x8xbf16>
    "tpu.trace_start"() <{level = 10 : i32, message = "hts,hks->htk"}> : () -> ()
    %cst_32 = arith.constant dense<0.000000e+00> : vector<4x8x8xf32>
    %98 = tpu.matmul %79, %88, %cst_32 {dimension_numbers = #tpu.dot_dimension_numbers<[2], [2], [1], [1], [0, 0, 0, 1, 1, 1], [0], [0]>} : vector<4x8x8xbf16>, vector<4x8x8xbf16>, vector<4x8x8xf32> -> vector<4x8x8xf32>
    "tpu.trace_stop"() : () -> ()
    %99 = vector.broadcast %65 : vector<1x8x8xf32> to vector<4x8x8xf32>
    %100 = arith.addf %98, %99 : vector<4x8x8xf32>
    %cst_33 = arith.constant dense<0xFF800000> : vector<4x8xf32>
    %101 = vector.multi_reduction <maximumf>, %100, %cst_33 [2] : vector<4x8x8xf32> to vector<4x8xf32>
    %102 = vector.shape_cast %101 : vector<4x8xf32> to vector<4x8x1xf32>
    %103 = vector.broadcast %102 : vector<4x8x1xf32> to vector<4x8x8xf32>
    %104 = arith.subf %100, %103 : vector<4x8x8xf32>
    %105 = math.exp %104 : vector<4x8x8xf32>
    %cst_34 = arith.constant dense<0.000000e+00> : vector<4x8xf32>
    %106 = vector.multi_reduction <add>, %105, %cst_34 [2] : vector<4x8x8xf32> to vector<4x8xf32>
    %107 = vector.shape_cast %106 : vector<4x8xf32> to vector<4x8x1xf32>
    %108 = tpu.reciprocal %107 {approx = true} : vector<4x8x1xf32> -> vector<4x8x1xf32>
    %109 = vector.broadcast %108 : vector<4x8x1xf32> to vector<4x8x8xf32>
    %110 = arith.mulf %105, %109 : vector<4x8x8xf32>
    %111 = arith.truncf %110 : vector<4x8x8xf32> to vector<4x8x8xbf16>
    "tpu.trace_start"() <{level = 10 : i32, message = "htk,hks->hts"}> : () -> ()
    %cst_35 = arith.constant dense<0.000000e+00> : vector<4x8x8xf32>
    %112 = tpu.matmul %111, %97, %cst_35 {dimension_numbers = #tpu.dot_dimension_numbers<[2], [1], [1], [2], [0, 0, 0, 1, 1, 2], [0], [0]>} : vector<4x8x8xbf16>, vector<4x8x8xbf16>, vector<4x8x8xf32> -> vector<4x8x8xf32>
    "tpu.trace_stop"() : () -> ()
    %113 = arith.truncf %112 : vector<4x8x8xf32> to vector<4x8x8xbf16>
    %c0_36 = arith.constant 0 : index
    %c0_37 = arith.constant 0 : index
    %c0_38 = arith.constant 0 : index
    %c0_39 = arith.constant 0 : index
    %114 = vector.load %arg5[%c0_36, %c0_37, %c0_38, %c0_39] : memref<2x4x8x32xbf16, #tpu.memory_space<vmem>>, vector<1x4x8x32xbf16>
    %115 = vector.shape_cast %114 : vector<1x4x8x32xbf16> to vector<4x8x32xbf16>
    "tpu.trace_start"() <{level = 10 : i32, message = "hts,hse->hte"}> : () -> ()
    %cst_40 = arith.constant dense<0.000000e+00> : vector<4x8x32xf32>
    %116 = tpu.matmul %113, %115, %cst_40 {dimension_numbers = #tpu.dot_dimension_numbers<[2], [1], [1], [2], [0, 0, 0, 1, 1, 2], [0], [0]>} : vector<4x8x8xbf16>, vector<4x8x32xbf16>, vector<4x8x32xf32> -> vector<4x8x32xf32>
    "tpu.trace_stop"() : () -> ()
    %cst_41 = arith.constant dense<0.000000e+00> : vector<8x32xf32>
    %117 = vector.multi_reduction <add>, %116, %cst_41 [0] : vector<4x8x32xf32> to vector<8x32xf32>
    %c0_42 = arith.constant 0 : index
    %c0_43 = arith.constant 0 : index
    %c0_44 = arith.constant 0 : index
    %118 = vector.load %arg6[%c0_42, %c0_43, %c0_44] : memref<2x1x32xf32, #tpu.memory_space<vmem>>, vector<1x1x32xf32>
    %119 = vector.shape_cast %118 : vector<1x1x32xf32> to vector<1x32xf32>
    %120 = vector.broadcast %119 : vector<1x32xf32> to vector<8x32xf32>
    %121 = arith.addf %117, %120 : vector<8x32xf32>
    %122 = arith.addf %121, %58 : vector<8x32xf32>
    %c0_45 = arith.constant 0 : index
    %c0_46 = arith.constant 0 : index
    %c0_47 = arith.constant 0 : index
    %123 = vector.load %arg7[%c0_45, %c0_46, %c0_47] : memref<2x1x32xf32, #tpu.memory_space<vmem>>, vector<1x1x32xf32>
    %124 = vector.shape_cast %123 : vector<1x1x32xf32> to vector<1x32xf32>
    %c0_48 = arith.constant 0 : index
    %c0_49 = arith.constant 0 : index
    %c0_50 = arith.constant 0 : index
    %125 = vector.load %arg8[%c0_48, %c0_49, %c0_50] : memref<2x1x32xf32, #tpu.memory_space<vmem>>, vector<1x1x32xf32>
    %126 = vector.shape_cast %125 : vector<1x1x32xf32> to vector<1x32xf32>
    %cst_51 = arith.constant dense<0.000000e+00> : vector<8xf32>
    %127 = vector.multi_reduction <add>, %122, %cst_51 [1] : vector<8x32xf32> to vector<8xf32>
    %128 = vector.shape_cast %127 : vector<8xf32> to vector<8x1xf32>
    %cst_52 = arith.constant 3.200000e+01 : f32
    %129 = vector.broadcast %cst_52 : f32 to vector<8x1xf32>
    %130 = arith.divf %128, %129 : vector<8x1xf32>
    %131 = vector.broadcast %130 : vector<8x1xf32> to vector<8x32xf32>
    %132 = arith.subf %122, %131 : vector<8x32xf32>
    %133 = arith.mulf %132, %132 : vector<8x32xf32>
    %cst_53 = arith.constant dense<0.000000e+00> : vector<8xf32>
    %134 = vector.multi_reduction <add>, %133, %cst_53 [1] : vector<8x32xf32> to vector<8xf32>
    %135 = vector.shape_cast %134 : vector<8xf32> to vector<8x1xf32>
    %cst_54 = arith.constant 3.200000e+01 : f32
    %136 = vector.broadcast %cst_54 : f32 to vector<8x1xf32>
    %137 = arith.divf %135, %136 : vector<8x1xf32>
    %cst_55 = arith.constant 9.99999974E-6 : f32
    %138 = vector.broadcast %cst_55 : f32 to vector<8x1xf32>
    %139 = arith.addf %137, %138 : vector<8x1xf32>
    %140 = math.rsqrt %139 : vector<8x1xf32>
    %141 = vector.broadcast %140 : vector<8x1xf32> to vector<8x32xf32>
    %142 = arith.mulf %132, %141 : vector<8x32xf32>
    %143 = vector.broadcast %124 : vector<1x32xf32> to vector<8x32xf32>
    %144 = arith.mulf %142, %143 : vector<8x32xf32>
    %145 = vector.broadcast %126 : vector<1x32xf32> to vector<8x32xf32>
    %146 = arith.addf %144, %145 : vector<8x32xf32>
    %147 = arith.truncf %146 : vector<8x32xf32> to vector<8x32xbf16>
    %c0_56 = arith.constant 0 : index
    %c0_57 = arith.constant 0 : index
    %c0_58 = arith.constant 0 : index
    %148 = vector.load %arg9[%c0_56, %c0_57, %c0_58] : memref<2x32x128xbf16, #tpu.memory_space<vmem>>, vector<1x32x128xbf16>
    %149 = vector.shape_cast %148 : vector<1x32x128xbf16> to vector<32x128xbf16>
    %cst_59 = arith.constant dense<0.000000e+00> : vector<8x128xf32>
    %150 = tpu.matmul %147, %149, %cst_59 {dimension_numbers = #tpu.dot_dimension_numbers<[1], [0], [0], [1], [0, 0, 1, 1], [], []>} : vector<8x32xbf16>, vector<32x128xbf16>, vector<8x128xf32> -> vector<8x128xf32>
    %c0_60 = arith.constant 0 : index
    %c0_61 = arith.constant 0 : index
    %c0_62 = arith.constant 0 : index
    %151 = vector.load %arg10[%c0_60, %c0_61, %c0_62] : memref<2x1x128xf32, #tpu.memory_space<vmem>>, vector<1x1x128xf32>
    %152 = vector.shape_cast %151 : vector<1x1x128xf32> to vector<1x128xf32>
    %153 = vector.broadcast %152 : vector<1x128xf32> to vector<8x128xf32>
    %154 = arith.addf %150, %153 : vector<8x128xf32>
    %cst_63 = arith.constant 0.000000e+00 : f32
    %155 = vector.broadcast %cst_63 : f32 to vector<8x128xf32>
    %156 = arith.maximumf %154, %155 : vector<8x128xf32>
    %157 = arith.truncf %156 : vector<8x128xf32> to vector<8x128xbf16>
    %c0_64 = arith.constant 0 : index
    %c0_65 = arith.constant 0 : index
    %c0_66 = arith.constant 0 : index
    %158 = vector.load %arg11[%c0_64, %c0_65, %c0_66] : memref<2x128x32xbf16, #tpu.memory_space<vmem>>, vector<1x128x32xbf16>
    %159 = vector.shape_cast %158 : vector<1x128x32xbf16> to vector<128x32xbf16>
    %cst_67 = arith.constant dense<0.000000e+00> : vector<8x32xf32>
    %160 = tpu.matmul %157, %159, %cst_67 {dimension_numbers = #tpu.dot_dimension_numbers<[1], [0], [0], [1], [0, 0, 1, 1], [], []>} : vector<8x128xbf16>, vector<128x32xbf16>, vector<8x32xf32> -> vector<8x32xf32>
    %c0_68 = arith.constant 0 : index
    %c0_69 = arith.constant 0 : index
    %c0_70 = arith.constant 0 : index
    %161 = vector.load %arg12[%c0_68, %c0_69, %c0_70] : memref<2x1x32xf32, #tpu.memory_space<vmem>>, vector<1x1x32xf32>
    %162 = vector.shape_cast %161 : vector<1x1x32xf32> to vector<1x32xf32>
    %163 = vector.broadcast %162 : vector<1x32xf32> to vector<8x32xf32>
    %164 = arith.addf %160, %163 : vector<8x32xf32>
    %165 = arith.addf %164, %146 : vector<8x32xf32>
    %c0_71 = arith.constant 0 : index
    %c0_72 = arith.constant 0 : index
    %c0_73 = arith.constant 0 : index
    %166 = vector.load %arg13[%c0_71, %c0_72, %c0_73] : memref<2x1x32xf32, #tpu.memory_space<vmem>>, vector<1x1x32xf32>
    %167 = vector.shape_cast %166 : vector<1x1x32xf32> to vector<1x32xf32>
    %c0_74 = arith.constant 0 : index
    %c0_75 = arith.constant 0 : index
    %c0_76 = arith.constant 0 : index
    %168 = vector.load %arg14[%c0_74, %c0_75, %c0_76] : memref<2x1x32xf32, #tpu.memory_space<vmem>>, vector<1x1x32xf32>
    %169 = vector.shape_cast %168 : vector<1x1x32xf32> to vector<1x32xf32>
    %cst_77 = arith.constant dense<0.000000e+00> : vector<8xf32>
    %170 = vector.multi_reduction <add>, %165, %cst_77 [1] : vector<8x32xf32> to vector<8xf32>
    %171 = vector.shape_cast %170 : vector<8xf32> to vector<8x1xf32>
    %cst_78 = arith.constant 3.200000e+01 : f32
    %172 = vector.broadcast %cst_78 : f32 to vector<8x1xf32>
    %173 = arith.divf %171, %172 : vector<8x1xf32>
    %174 = vector.broadcast %173 : vector<8x1xf32> to vector<8x32xf32>
    %175 = arith.subf %165, %174 : vector<8x32xf32>
    %176 = arith.mulf %175, %175 : vector<8x32xf32>
    %cst_79 = arith.constant dense<0.000000e+00> : vector<8xf32>
    %177 = vector.multi_reduction <add>, %176, %cst_79 [1] : vector<8x32xf32> to vector<8xf32>
    %178 = vector.shape_cast %177 : vector<8xf32> to vector<8x1xf32>
    %cst_80 = arith.constant 3.200000e+01 : f32
    %179 = vector.broadcast %cst_80 : f32 to vector<8x1xf32>
    %180 = arith.divf %178, %179 : vector<8x1xf32>
    %cst_81 = arith.constant 9.99999974E-6 : f32
    %181 = vector.broadcast %cst_81 : f32 to vector<8x1xf32>
    %182 = arith.addf %180, %181 : vector<8x1xf32>
    %183 = math.rsqrt %182 : vector<8x1xf32>
    %184 = vector.broadcast %183 : vector<8x1xf32> to vector<8x32xf32>
    %185 = arith.mulf %175, %184 : vector<8x32xf32>
    %186 = vector.broadcast %167 : vector<1x32xf32> to vector<8x32xf32>
    %187 = arith.mulf %185, %186 : vector<8x32xf32>
    %188 = vector.broadcast %169 : vector<1x32xf32> to vector<8x32xf32>
    %189 = arith.addf %187, %188 : vector<8x32xf32>
    %190 = arith.truncf %189 : vector<8x32xf32> to vector<8x32xbf16>
    %c1_82 = arith.constant 1 : index
    %c0_83 = arith.constant 0 : index
    %c0_84 = arith.constant 0 : index
    %191 = vector.load %arg4[%c1_82, %c0_83, %c0_84] : memref<2x32x96xbf16, #tpu.memory_space<vmem>>, vector<1x32x96xbf16>
    %192 = vector.shape_cast %191 : vector<1x32x96xbf16> to vector<32x96xbf16>
    %cst_85 = arith.constant dense<0.000000e+00> : vector<8x96xf32>
    %193 = tpu.matmul %190, %192, %cst_85 {dimension_numbers = #tpu.dot_dimension_numbers<[1], [0], [0], [1], [0, 0, 1, 1], [], []>} : vector<8x32xbf16>, vector<32x96xbf16>, vector<8x96xf32> -> vector<8x96xf32>
    %194 = arith.truncf %193 : vector<8x96xf32> to vector<8x96xbf16>
    %195 = vector.extract_strided_slice %194 {offsets = [0, 0], sizes = [8, 8], strides = [1, 1]} : vector<8x96xbf16> to vector<8x8xbf16>
    %196 = vector.shape_cast %195 : vector<8x8xbf16> to vector<1x8x8xbf16>
    %197 = vector.extract_strided_slice %194 {offsets = [0, 8], sizes = [8, 8], strides = [1, 1]} : vector<8x96xbf16> to vector<8x8xbf16>
    %198 = vector.shape_cast %197 : vector<8x8xbf16> to vector<1x8x8xbf16>
    %199 = vector.extract_strided_slice %194 {offsets = [0, 16], sizes = [8, 8], strides = [1, 1]} : vector<8x96xbf16> to vector<8x8xbf16>
    %200 = vector.shape_cast %199 : vector<8x8xbf16> to vector<1x8x8xbf16>
    %201 = vector.extract_strided_slice %194 {offsets = [0, 24], sizes = [8, 8], strides = [1, 1]} : vector<8x96xbf16> to vector<8x8xbf16>
    %202 = vector.shape_cast %201 : vector<8x8xbf16> to vector<1x8x8xbf16>
    %203 = tpu.concatenate %196, %198, %200, %202 in 0 : vector<1x8x8xbf16>, vector<1x8x8xbf16>, vector<1x8x8xbf16>, vector<1x8x8xbf16> -> vector<4x8x8xbf16>
    %204 = vector.extract_strided_slice %194 {offsets = [0, 32], sizes = [8, 8], strides = [1, 1]} : vector<8x96xbf16> to vector<8x8xbf16>
    %205 = vector.shape_cast %204 : vector<8x8xbf16> to vector<1x8x8xbf16>
    %206 = vector.extract_strided_slice %194 {offsets = [0, 40], sizes = [8, 8], strides = [1, 1]} : vector<8x96xbf16> to vector<8x8xbf16>
    %207 = vector.shape_cast %206 : vector<8x8xbf16> to vector<1x8x8xbf16>
    %208 = vector.extract_strided_slice %194 {offsets = [0, 48], sizes = [8, 8], strides = [1, 1]} : vector<8x96xbf16> to vector<8x8xbf16>
    %209 = vector.shape_cast %208 : vector<8x8xbf16> to vector<1x8x8xbf16>
    %210 = vector.extract_strided_slice %194 {offsets = [0, 56], sizes = [8, 8], strides = [1, 1]} : vector<8x96xbf16> to vector<8x8xbf16>
    %211 = vector.shape_cast %210 : vector<8x8xbf16> to vector<1x8x8xbf16>
    %212 = tpu.concatenate %205, %207, %209, %211 in 0 : vector<1x8x8xbf16>, vector<1x8x8xbf16>, vector<1x8x8xbf16>, vector<1x8x8xbf16> -> vector<4x8x8xbf16>
    %213 = vector.extract_strided_slice %194 {offsets = [0, 64], sizes = [8, 8], strides = [1, 1]} : vector<8x96xbf16> to vector<8x8xbf16>
    %214 = vector.shape_cast %213 : vector<8x8xbf16> to vector<1x8x8xbf16>
    %215 = vector.extract_strided_slice %194 {offsets = [0, 72], sizes = [8, 8], strides = [1, 1]} : vector<8x96xbf16> to vector<8x8xbf16>
    %216 = vector.shape_cast %215 : vector<8x8xbf16> to vector<1x8x8xbf16>
    %217 = vector.extract_strided_slice %194 {offsets = [0, 80], sizes = [8, 8], strides = [1, 1]} : vector<8x96xbf16> to vector<8x8xbf16>
    %218 = vector.shape_cast %217 : vector<8x8xbf16> to vector<1x8x8xbf16>
    %219 = vector.extract_strided_slice %194 {offsets = [0, 88], sizes = [8, 8], strides = [1, 1]} : vector<8x96xbf16> to vector<8x8xbf16>
    %220 = vector.shape_cast %219 : vector<8x8xbf16> to vector<1x8x8xbf16>
    %221 = tpu.concatenate %214, %216, %218, %220 in 0 : vector<1x8x8xbf16>, vector<1x8x8xbf16>, vector<1x8x8xbf16>, vector<1x8x8xbf16> -> vector<4x8x8xbf16>
    "tpu.trace_start"() <{level = 10 : i32, message = "hts,hks->htk"}> : () -> ()
    %cst_86 = arith.constant dense<0.000000e+00> : vector<4x8x8xf32>
    %222 = tpu.matmul %203, %212, %cst_86 {dimension_numbers = #tpu.dot_dimension_numbers<[2], [2], [1], [1], [0, 0, 0, 1, 1, 1], [0], [0]>} : vector<4x8x8xbf16>, vector<4x8x8xbf16>, vector<4x8x8xf32> -> vector<4x8x8xf32>
    "tpu.trace_stop"() : () -> ()
    %223 = vector.broadcast %65 : vector<1x8x8xf32> to vector<4x8x8xf32>
    %224 = arith.addf %222, %223 : vector<4x8x8xf32>
    %cst_87 = arith.constant dense<0xFF800000> : vector<4x8xf32>
    %225 = vector.multi_reduction <maximumf>, %224, %cst_87 [2] : vector<4x8x8xf32> to vector<4x8xf32>
    %226 = vector.shape_cast %225 : vector<4x8xf32> to vector<4x8x1xf32>
    %227 = vector.broadcast %226 : vector<4x8x1xf32> to vector<4x8x8xf32>
    %228 = arith.subf %224, %227 : vector<4x8x8xf32>
    %229 = math.exp %228 : vector<4x8x8xf32>
    %cst_88 = arith.constant dense<0.000000e+00> : vector<4x8xf32>
    %230 = vector.multi_reduction <add>, %229, %cst_88 [2] : vector<4x8x8xf32> to vector<4x8xf32>
    %231 = vector.shape_cast %230 : vector<4x8xf32> to vector<4x8x1xf32>
    %232 = tpu.reciprocal %231 {approx = true} : vector<4x8x1xf32> -> vector<4x8x1xf32>
    %233 = vector.broadcast %232 : vector<4x8x1xf32> to vector<4x8x8xf32>
    %234 = arith.mulf %229, %233 : vector<4x8x8xf32>
    %235 = arith.truncf %234 : vector<4x8x8xf32> to vector<4x8x8xbf16>
    "tpu.trace_start"() <{level = 10 : i32, message = "htk,hks->hts"}> : () -> ()
    %cst_89 = arith.constant dense<0.000000e+00> : vector<4x8x8xf32>
    %236 = tpu.matmul %235, %221, %cst_89 {dimension_numbers = #tpu.dot_dimension_numbers<[2], [1], [1], [2], [0, 0, 0, 1, 1, 2], [0], [0]>} : vector<4x8x8xbf16>, vector<4x8x8xbf16>, vector<4x8x8xf32> -> vector<4x8x8xf32>
    "tpu.trace_stop"() : () -> ()
    %237 = arith.truncf %236 : vector<4x8x8xf32> to vector<4x8x8xbf16>
    %c1_90 = arith.constant 1 : index
    %c0_91 = arith.constant 0 : index
    %c0_92 = arith.constant 0 : index
    %c0_93 = arith.constant 0 : index
    %238 = vector.load %arg5[%c1_90, %c0_91, %c0_92, %c0_93] : memref<2x4x8x32xbf16, #tpu.memory_space<vmem>>, vector<1x4x8x32xbf16>
    %239 = vector.shape_cast %238 : vector<1x4x8x32xbf16> to vector<4x8x32xbf16>
    "tpu.trace_start"() <{level = 10 : i32, message = "hts,hse->hte"}> : () -> ()
    %cst_94 = arith.constant dense<0.000000e+00> : vector<4x8x32xf32>
    %240 = tpu.matmul %237, %239, %cst_94 {dimension_numbers = #tpu.dot_dimension_numbers<[2], [1], [1], [2], [0, 0, 0, 1, 1, 2], [0], [0]>} : vector<4x8x8xbf16>, vector<4x8x32xbf16>, vector<4x8x32xf32> -> vector<4x8x32xf32>
    "tpu.trace_stop"() : () -> ()
    %cst_95 = arith.constant dense<0.000000e+00> : vector<8x32xf32>
    %241 = vector.multi_reduction <add>, %240, %cst_95 [0] : vector<4x8x32xf32> to vector<8x32xf32>
    %c1_96 = arith.constant 1 : index
    %c0_97 = arith.constant 0 : index
    %c0_98 = arith.constant 0 : index
    %242 = vector.load %arg6[%c1_96, %c0_97, %c0_98] : memref<2x1x32xf32, #tpu.memory_space<vmem>>, vector<1x1x32xf32>
    %243 = vector.shape_cast %242 : vector<1x1x32xf32> to vector<1x32xf32>
    %244 = vector.broadcast %243 : vector<1x32xf32> to vector<8x32xf32>
    %245 = arith.addf %241, %244 : vector<8x32xf32>
    %246 = arith.addf %245, %189 : vector<8x32xf32>
    %c1_99 = arith.constant 1 : index
    %c0_100 = arith.constant 0 : index
    %c0_101 = arith.constant 0 : index
    %247 = vector.load %arg7[%c1_99, %c0_100, %c0_101] : memref<2x1x32xf32, #tpu.memory_space<vmem>>, vector<1x1x32xf32>
    %248 = vector.shape_cast %247 : vector<1x1x32xf32> to vector<1x32xf32>
    %c1_102 = arith.constant 1 : index
    %c0_103 = arith.constant 0 : index
    %c0_104 = arith.constant 0 : index
    %249 = vector.load %arg8[%c1_102, %c0_103, %c0_104] : memref<2x1x32xf32, #tpu.memory_space<vmem>>, vector<1x1x32xf32>
    %250 = vector.shape_cast %249 : vector<1x1x32xf32> to vector<1x32xf32>
    %cst_105 = arith.constant dense<0.000000e+00> : vector<8xf32>
    %251 = vector.multi_reduction <add>, %246, %cst_105 [1] : vector<8x32xf32> to vector<8xf32>
    %252 = vector.shape_cast %251 : vector<8xf32> to vector<8x1xf32>
    %cst_106 = arith.constant 3.200000e+01 : f32
    %253 = vector.broadcast %cst_106 : f32 to vector<8x1xf32>
    %254 = arith.divf %252, %253 : vector<8x1xf32>
    %255 = vector.broadcast %254 : vector<8x1xf32> to vector<8x32xf32>
    %256 = arith.subf %246, %255 : vector<8x32xf32>
    %257 = arith.mulf %256, %256 : vector<8x32xf32>
    %cst_107 = arith.constant dense<0.000000e+00> : vector<8xf32>
    %258 = vector.multi_reduction <add>, %257, %cst_107 [1] : vector<8x32xf32> to vector<8xf32>
    %259 = vector.shape_cast %258 : vector<8xf32> to vector<8x1xf32>
    %cst_108 = arith.constant 3.200000e+01 : f32
    %260 = vector.broadcast %cst_108 : f32 to vector<8x1xf32>
    %261 = arith.divf %259, %260 : vector<8x1xf32>
    %cst_109 = arith.constant 9.99999974E-6 : f32
    %262 = vector.broadcast %cst_109 : f32 to vector<8x1xf32>
    %263 = arith.addf %261, %262 : vector<8x1xf32>
    %264 = math.rsqrt %263 : vector<8x1xf32>
    %265 = vector.broadcast %264 : vector<8x1xf32> to vector<8x32xf32>
    %266 = arith.mulf %256, %265 : vector<8x32xf32>
    %267 = vector.broadcast %248 : vector<1x32xf32> to vector<8x32xf32>
    %268 = arith.mulf %266, %267 : vector<8x32xf32>
    %269 = vector.broadcast %250 : vector<1x32xf32> to vector<8x32xf32>
    %270 = arith.addf %268, %269 : vector<8x32xf32>
    %271 = arith.truncf %270 : vector<8x32xf32> to vector<8x32xbf16>
    %c1_110 = arith.constant 1 : index
    %c0_111 = arith.constant 0 : index
    %c0_112 = arith.constant 0 : index
    %272 = vector.load %arg9[%c1_110, %c0_111, %c0_112] : memref<2x32x128xbf16, #tpu.memory_space<vmem>>, vector<1x32x128xbf16>
    %273 = vector.shape_cast %272 : vector<1x32x128xbf16> to vector<32x128xbf16>
    %cst_113 = arith.constant dense<0.000000e+00> : vector<8x128xf32>
    %274 = tpu.matmul %271, %273, %cst_113 {dimension_numbers = #tpu.dot_dimension_numbers<[1], [0], [0], [1], [0, 0, 1, 1], [], []>} : vector<8x32xbf16>, vector<32x128xbf16>, vector<8x128xf32> -> vector<8x128xf32>
    %c1_114 = arith.constant 1 : index
    %c0_115 = arith.constant 0 : index
    %c0_116 = arith.constant 0 : index
    %275 = vector.load %arg10[%c1_114, %c0_115, %c0_116] : memref<2x1x128xf32, #tpu.memory_space<vmem>>, vector<1x1x128xf32>
    %276 = vector.shape_cast %275 : vector<1x1x128xf32> to vector<1x128xf32>
    %277 = vector.broadcast %276 : vector<1x128xf32> to vector<8x128xf32>
    %278 = arith.addf %274, %277 : vector<8x128xf32>
    %cst_117 = arith.constant 0.000000e+00 : f32
    %279 = vector.broadcast %cst_117 : f32 to vector<8x128xf32>
    %280 = arith.maximumf %278, %279 : vector<8x128xf32>
    %281 = arith.truncf %280 : vector<8x128xf32> to vector<8x128xbf16>
    %c1_118 = arith.constant 1 : index
    %c0_119 = arith.constant 0 : index
    %c0_120 = arith.constant 0 : index
    %282 = vector.load %arg11[%c1_118, %c0_119, %c0_120] : memref<2x128x32xbf16, #tpu.memory_space<vmem>>, vector<1x128x32xbf16>
    %283 = vector.shape_cast %282 : vector<1x128x32xbf16> to vector<128x32xbf16>
    %cst_121 = arith.constant dense<0.000000e+00> : vector<8x32xf32>
    %284 = tpu.matmul %281, %283, %cst_121 {dimension_numbers = #tpu.dot_dimension_numbers<[1], [0], [0], [1], [0, 0, 1, 1], [], []>} : vector<8x128xbf16>, vector<128x32xbf16>, vector<8x32xf32> -> vector<8x32xf32>
    %c1_122 = arith.constant 1 : index
    %c0_123 = arith.constant 0 : index
    %c0_124 = arith.constant 0 : index
    %285 = vector.load %arg12[%c1_122, %c0_123, %c0_124] : memref<2x1x32xf32, #tpu.memory_space<vmem>>, vector<1x1x32xf32>
    %286 = vector.shape_cast %285 : vector<1x1x32xf32> to vector<1x32xf32>
    %287 = vector.broadcast %286 : vector<1x32xf32> to vector<8x32xf32>
    %288 = arith.addf %284, %287 : vector<8x32xf32>
    %289 = arith.addf %288, %270 : vector<8x32xf32>
    %c1_125 = arith.constant 1 : index
    %c0_126 = arith.constant 0 : index
    %c0_127 = arith.constant 0 : index
    %290 = vector.load %arg13[%c1_125, %c0_126, %c0_127] : memref<2x1x32xf32, #tpu.memory_space<vmem>>, vector<1x1x32xf32>
    %291 = vector.shape_cast %290 : vector<1x1x32xf32> to vector<1x32xf32>
    %c1_128 = arith.constant 1 : index
    %c0_129 = arith.constant 0 : index
    %c0_130 = arith.constant 0 : index
    %292 = vector.load %arg14[%c1_128, %c0_129, %c0_130] : memref<2x1x32xf32, #tpu.memory_space<vmem>>, vector<1x1x32xf32>
    %293 = vector.shape_cast %292 : vector<1x1x32xf32> to vector<1x32xf32>
    %cst_131 = arith.constant dense<0.000000e+00> : vector<8xf32>
    %294 = vector.multi_reduction <add>, %289, %cst_131 [1] : vector<8x32xf32> to vector<8xf32>
    %295 = vector.shape_cast %294 : vector<8xf32> to vector<8x1xf32>
    %cst_132 = arith.constant 3.200000e+01 : f32
    %296 = vector.broadcast %cst_132 : f32 to vector<8x1xf32>
    %297 = arith.divf %295, %296 : vector<8x1xf32>
    %298 = vector.broadcast %297 : vector<8x1xf32> to vector<8x32xf32>
    %299 = arith.subf %289, %298 : vector<8x32xf32>
    %300 = arith.mulf %299, %299 : vector<8x32xf32>
    %cst_133 = arith.constant dense<0.000000e+00> : vector<8xf32>
    %301 = vector.multi_reduction <add>, %300, %cst_133 [1] : vector<8x32xf32> to vector<8xf32>
    %302 = vector.shape_cast %301 : vector<8xf32> to vector<8x1xf32>
    %cst_134 = arith.constant 3.200000e+01 : f32
    %303 = vector.broadcast %cst_134 : f32 to vector<8x1xf32>
    %304 = arith.divf %302, %303 : vector<8x1xf32>
    %cst_135 = arith.constant 9.99999974E-6 : f32
    %305 = vector.broadcast %cst_135 : f32 to vector<8x1xf32>
    %306 = arith.addf %304, %305 : vector<8x1xf32>
    %307 = math.rsqrt %306 : vector<8x1xf32>
    %308 = vector.broadcast %307 : vector<8x1xf32> to vector<8x32xf32>
    %309 = arith.mulf %299, %308 : vector<8x32xf32>
    %310 = vector.broadcast %291 : vector<1x32xf32> to vector<8x32xf32>
    %311 = arith.mulf %309, %310 : vector<8x32xf32>
    %312 = vector.broadcast %293 : vector<1x32xf32> to vector<8x32xf32>
    %313 = arith.addf %311, %312 : vector<8x32xf32>
    %314 = arith.truncf %313 : vector<8x32xf32> to vector<8x32xbf16>
    %c0_136 = arith.constant 0 : index
    %c0_137 = arith.constant 0 : index
    %315 = vector.load %arg15[%c0_136, %c0_137] : memref<32x128xbf16, #tpu.memory_space<vmem>>, vector<32x128xbf16>
    %cst_138 = arith.constant dense<0.000000e+00> : vector<8x128xf32>
    %316 = tpu.matmul %314, %315, %cst_138 {dimension_numbers = #tpu.dot_dimension_numbers<[1], [0], [0], [1], [0, 0, 1, 1], [], []>} : vector<8x32xbf16>, vector<32x128xbf16>, vector<8x128xf32> -> vector<8x128xf32>
    %c0_139 = arith.constant 0 : index
    %c0_140 = arith.constant 0 : index
    %317 = vector.load %arg16[%c0_139, %c0_140] : memref<1x128xf32, #tpu.memory_space<vmem>>, vector<1x128xf32>
    %318 = vector.broadcast %317 : vector<1x128xf32> to vector<8x128xf32>
    %319 = arith.addf %316, %318 : vector<8x128xf32>
    %cst_141 = arith.constant dense<0xFF800000> : vector<8xf32>
    %320 = vector.multi_reduction <maximumf>, %319, %cst_141 [1] : vector<8x128xf32> to vector<8xf32>
    %321 = vector.shape_cast %320 : vector<8xf32> to vector<8x1xf32>
    %322 = vector.broadcast %321 : vector<8x1xf32> to vector<8x128xf32>
    %323 = arith.subf %319, %322 : vector<8x128xf32>
    %324 = math.exp %323 : vector<8x128xf32>
    %cst_142 = arith.constant dense<0.000000e+00> : vector<8xf32>
    %325 = vector.multi_reduction <add>, %324, %cst_142 [1] : vector<8x128xf32> to vector<8xf32>
    %326 = vector.shape_cast %325 : vector<8xf32> to vector<8x1xf32>
    %327 = math.log %326 : vector<8x1xf32>
    %328 = vector.broadcast %327 : vector<8x1xf32> to vector<8x128xf32>
    %329 = arith.subf %323, %328 : vector<8x128xf32>
    %c0_143 = arith.constant 0 : index
    %c0_144 = arith.constant 0 : index
    %330 = vector.load %arg17[%c0_143, %c0_144] : memref<8x128xf32, #tpu.memory_space<vmem>>, vector<8x128xf32>
    tpu.vector_store %arg17[%c0_143, %c0_144], %329 {strides = array<i32>} : memref<8x128xf32, #tpu.memory_space<vmem>>, vector<8x128xf32>,
    return
  }
  func.func @transform_0(%arg0: i32, %arg1: memref<16xi32, #tpu.memory_space<smem>>) -> (i32, i32) {
    %c0_i32 = arith.constant 0 : i32
    %c0_i32_0 = arith.constant 0 : i32
    %c0_i32_1 = arith.constant 0 : i32
    return %c0_i32, %c0_i32_0 : i32, i32
  }
  func.func @transform_1(%arg0: i32, %arg1: memref<16xi32, #tpu.memory_space<smem>>) -> (i32, i32) {
    %c0_i32 = arith.constant 0 : i32
    %c0_i32_0 = arith.constant 0 : i32
    %c0_i32_1 = arith.constant 0 : i32
    return %c0_i32, %c0_i32_0 : i32, i32
  }
  func.func @transform_2(%arg0: i32, %arg1: memref<16xi32, #tpu.memory_space<smem>>) -> (i32, i32, i32) {
    %c0_i32 = arith.constant 0 : i32
    %c0_i32_0 = arith.constant 0 : i32
    %c0_i32_1 = arith.constant 0 : i32
    %c0_i32_2 = arith.constant 0 : i32
    return %c0_i32, %c0_i32_0, %c0_i32_1 : i32, i32, i32
  }
  func.func @transform_3(%arg0: i32, %arg1: memref<16xi32, #tpu.memory_space<smem>>) -> (i32, i32, i32, i32) {
    %c0_i32 = arith.constant 0 : i32
    %c0_i32_0 = arith.constant 0 : i32
    %c0_i32_1 = arith.constant 0 : i32
    %c0_i32_2 = arith.constant 0 : i32
    %c0_i32_3 = arith.constant 0 : i32
    return %c0_i32, %c0_i32_0, %c0_i32_1, %c0_i32_2 : i32, i32, i32, i32
  }
  func.func @transform_4(%arg0: i32, %arg1: memref<16xi32, #tpu.memory_space<smem>>) -> (i32, i32, i32) {
    %c0_i32 = arith.constant 0 : i32
    %c0_i32_0 = arith.constant 0 : i32
    %c0_i32_1 = arith.constant 0 : i32
    %c0_i32_2 = arith.constant 0 : i32
    return %c0_i32, %c0_i32_0, %c0_i32_1 : i32, i32, i32
  }
  func.func @transform_5(%arg0: i32, %arg1: memref<16xi32, #tpu.memory_space<smem>>) -> (i32, i32, i32) {
    %c0_i32 = arith.constant 0 : i32
    %c0_i32_0 = arith.constant 0 : i32
    %c0_i32_1 = arith.constant 0 : i32
    %c0_i32_2 = arith.constant 0 : i32
    return %c0_i32, %c0_i32_0, %c0_i32_1 : i32, i32, i32
  }
  func.func @transform_6(%arg0: i32, %arg1: memref<16xi32, #tpu.memory_space<smem>>) -> (i32, i32, i32) {
    %c0_i32 = arith.constant 0 : i32
    %c0_i32_0 = arith.constant 0 : i32
    %c0_i32_1 = arith.constant 0 : i32
    %c0_i32_2 = arith.constant 0 : i32
    return %c0_i32, %c0_i32_0, %c0_i32_1 : i32, i32, i32
  }
  func.func @transform_7(%arg0: i32, %arg1: memref<16xi32, #tpu.memory_space<smem>>) -> (i32, i32, i32) {
    %c0_i32 = arith.constant 0 : i32
    %c0_i32_0 = arith.constant 0 : i32
    %c0_i32_1 = arith.constant 0 : i32
    %c0_i32_2 = arith.constant 0 : i32
    return %c0_i32, %c0_i32_0, %c0_i32_1 : i32, i32, i32
  }
  func.func @transform_8(%arg0: i32, %arg1: memref<16xi32, #tpu.memory_space<smem>>) -> (i32, i32, i32) {
    %c0_i32 = arith.constant 0 : i32
    %c0_i32_0 = arith.constant 0 : i32
    %c0_i32_1 = arith.constant 0 : i32
    %c0_i32_2 = arith.constant 0 : i32
    return %c0_i32, %c0_i32_0, %c0_i32_1 : i32, i32, i32
  }
  func.func @transform_9(%arg0: i32, %arg1: memref<16xi32, #tpu.memory_space<smem>>) -> (i32, i32, i32) {
    %c0_i32 = arith.constant 0 : i32
    %c0_i32_0 = arith.constant 0 : i32
    %c0_i32_1 = arith.constant 0 : i32
    %c0_i32_2 = arith.constant 0 : i32
    return %c0_i32, %c0_i32_0, %c0_i32_1 : i32, i32, i32
  }
  func.func @transform_10(%arg0: i32, %arg1: memref<16xi32, #tpu.memory_space<smem>>) -> (i32, i32, i32) {
    %c0_i32 = arith.constant 0 : i32
    %c0_i32_0 = arith.constant 0 : i32
    %c0_i32_1 = arith.constant 0 : i32
    %c0_i32_2 = arith.constant 0 : i32
    return %c0_i32, %c0_i32_0, %c0_i32_1 : i32, i32, i32
  }
  func.func @transform_11(%arg0: i32, %arg1: memref<16xi32, #tpu.memory_space<smem>>) -> (i32, i32, i32) {
    %c0_i32 = arith.constant 0 : i32
    %c0_i32_0 = arith.constant 0 : i32
    %c0_i32_1 = arith.constant 0 : i32
    %c0_i32_2 = arith.constant 0 : i32
    return %c0_i32, %c0_i32_0, %c0_i32_1 : i32, i32, i32
  }
  func.func @transform_12(%arg0: i32, %arg1: memref<16xi32, #tpu.memory_space<smem>>) -> (i32, i32, i32) {
    %c0_i32 = arith.constant 0 : i32
    %c0_i32_0 = arith.constant 0 : i32
    %c0_i32_1 = arith.constant 0 : i32
    %c0_i32_2 = arith.constant 0 : i32
    return %c0_i32, %c0_i32_0, %c0_i32_1 : i32, i32, i32
  }
  func.func @transform_13(%arg0: i32, %arg1: memref<16xi32, #tpu.memory_space<smem>>) -> (i32, i32) {
    %c0_i32 = arith.constant 0 : i32
    %c0_i32_0 = arith.constant 0 : i32
    %c0_i32_1 = arith.constant 0 : i32
    return %c0_i32, %c0_i32_0 : i32, i32
  }
  func.func @transform_14(%arg0: i32, %arg1: memref<16xi32, #tpu.memory_space<smem>>) -> (i32, i32) {
    %c0_i32 = arith.constant 0 : i32
    %c0_i32_0 = arith.constant 0 : i32
    %c0_i32_1 = arith.constant 0 : i32
    return %c0_i32, %c0_i32_0 : i32, i32
  }
  func.func @transform_15(%arg0: i32, %arg1: memref<16xi32, #tpu.memory_space<smem>>) -> (i32, i32) {
    %c0_i32 = arith.constant 0 : i32
    %c0_i32_0 = arith.constant 0 : i32
    return %arg0, %c0_i32 : i32, i32
  }
}

</mosaic_0001>

<llo_original>
// kernel: tpu_custom_call.1
$region0: #{tpu_custom_call.1}
  #allocation0 [shape = 'u32[]', space=smem, size = 0x4, offset = 0x4, fixed_abs, tag = 'smem constant byte address 0x4 - core index']
  #allocation1 [shape = 'u32[72,128]{1,0:T(1,128)}', space=vmem, size = 0x9000, scoped, tag = 'internal scratch']
  #allocation2 [shape = 'f32[8,32]{1,0:T(8,128)}', space=vmem, size = 0x1000, scoped, tag = 'scratch operand']
  #allocation3 [shape = 's32[1]{0}', space=sflag, size = 0x4, scoped, tag = 'scoped memory for tpu_custom_call.1']
  #allocation4 [shape = 'u8[512]{0}', space=smem, size = 0x200, scoped, tag = 'prefetched SMEM operand 0']
  %s0 = inlined_call_operand.vmem [shape: s32[16], index: 0, kind: input, shape index: {}]
  %s1 = inlined_call_operand.vmem [shape: f32[64,32], index: 1, kind: input, shape index: {}]
  %s2 = inlined_call_operand.vmem [shape: f32[8,32], index: 2, kind: input, shape index: {}]
  %s3 = inlined_call_operand.vmem [shape: bf16[2,32,96], index: 3, kind: input, shape index: {}]
  %s4 = inlined_call_operand.vmem [shape: bf16[2,4,8,32], index: 4, kind: input, shape index: {}]
  %s5 = inlined_call_operand.vmem [shape: f32[2,1,32], index: 5, kind: input, shape index: {}]
  %s6 = inlined_call_operand.vmem [shape: f32[2,1,32], index: 6, kind: input, shape index: {}]
  %s7 = inlined_call_operand.vmem [shape: f32[2,1,32], index: 7, kind: input, shape index: {}]
  %s8 = inlined_call_operand.vmem [shape: bf16[2,32,128], index: 8, kind: input, shape index: {}]
  %s9 = inlined_call_operand.vmem [shape: f32[2,1,128], index: 9, kind: input, shape index: {}]
  %s10 = inlined_call_operand.vmem [shape: bf16[2,128,32], index: 10, kind: input, shape index: {}]
  %s11 = inlined_call_operand.vmem [shape: f32[2,1,32], index: 11, kind: input, shape index: {}]
  %s12 = inlined_call_operand.vmem [shape: f32[2,1,32], index: 12, kind: input, shape index: {}]
  %s13 = inlined_call_operand.vmem [shape: f32[2,1,32], index: 13, kind: input, shape index: {}]
  %s14 = inlined_call_operand.vmem [shape: bf16[32,128], index: 14, kind: input, shape index: {}]
  %s15 = inlined_call_operand.vmem [shape: f32[1,128], index: 15, kind: input, shape index: {}]
  %s16 = inlined_call_operand.hbm [shape: f32[16,128], index: 16, kind: output, shape index: {}]
  %s17 = sld [smem:[#allocation0]]
  $region93: #{tpu_custom_call.1} parent=0
    _
  %s19 = ssub.s32 1, %s17
  %s20 = scalar_select 0, %s19, %s17
  %s22 = sshll.u32 %s0, 4
  %s23 = int_to_ptr.vmem [resolvable:$true] %s22
  %25 = dma.vmem_to_smem %s23, 16, [#allocation4], [#allocation3]
  %27 = dma.done [#allocation3], 16
  %28 = sfence
  $region1: #{tpu_custom_call.1} parent=0
    #allocation5 [shape = 'u8[8192]{0}', space=vmem, size = 0x2000, scoped, tag = 'output window, operand 0']
    #allocation6 [shape = 's32[2]{0}', space=sflag, size = 0x8, scoped, tag = 'scoped memory for tpu_custom_call.1']
    %29 = vsyncpa [#allocation6], 0
    %s30 = scalar_lea.sflag [#allocation6], 1
    %31 = vsyncpa %s30, 0
    loop: start=0, step=1, limit=4
    $region2: #{tpu_custom_call.1} parent=1 // loop_pre_header
      _
    $region3: #{tpu_custom_call.1} parent=1 // loop_header
      %s33 = sphi 0, %s37
      %p34 = scmp.ge.s32.totalorder %s33, 4
      %s41 = sphi 0, %s41
      %s43 = sphi 0, %s41
      %s44 = sphi 0, %s43
      %s58 = sphi 0, %s44
      %s62 = sphi 0, %s62
      %s64 = sphi 0, %s62
      %s65 = sphi 0, %s64
      %s79 = sphi 0, %s65
      %s83 = sphi 0, %s83
      %s85 = sphi 0, %s83
      %s86 = sphi 0, %s85
      %s100 = sphi 0, %s86
      %s104 = sphi 0, %s104
      %s106 = sphi 0, %s104
      %s107 = sphi 0, %s106
      %s121 = sphi 0, %s107
      %s125 = sphi 0, %s125
      %s127 = sphi 0, %s125
      %s128 = sphi 0, %s127
      %s142 = sphi 0, %s128
      %s146 = sphi 0, %s146
      %s148 = sphi 0, %s146
      %s149 = sphi 0, %s148
      %s163 = sphi 0, %s149
      %s167 = sphi 0, %s167
      %s169 = sphi 0, %s167
      %s170 = sphi 0, %s169
      %s184 = sphi 0, %s170
      %s188 = sphi 0, %s188
      %s190 = sphi 0, %s188
      %s191 = sphi 0, %s190
      %s205 = sphi 0, %s191
      %s209 = sphi 0, %s209
      %s211 = sphi 0, %s209
      %s212 = sphi 0, %s211
      %s226 = sphi 0, %s212
      %s230 = sphi 0, %s230
      %s232 = sphi 0, %s230
      %s233 = sphi 0, %s232
      %s247 = sphi 0, %s233
      %s251 = sphi 0, %s251
      %s253 = sphi 0, %s251
      %s254 = sphi 0, %s253
      %s268 = sphi 0, %s254
      %s272 = sphi 0, %s272
      %s274 = sphi 0, %s272
      %s275 = sphi 0, %s274
      %s289 = sphi 0, %s275
      %s293 = sphi 0, %s293
      %s295 = sphi 0, %s293
      %s296 = sphi 0, %s295
      %s310 = sphi 0, %s296
      %s314 = sphi 0, %s314
      %s316 = sphi 0, %s314
      %s317 = sphi 0, %s316
      %s331 = sphi 0, %s317
      %s335 = sphi 0, %s335
      %s337 = sphi 0, %s335
      %s338 = sphi 0, %s337
      %s352 = sphi 0, %s338
      %s358 = sphi 0, %s360
      %s361 = sphi 0, %s358
      %s362 = sphi 0, %s361
      %s378 = sphi 0, %s362
    $region4: #{tpu_custom_call.1} parent=1 // loop_header_branch
      %36 = sbr.rel (%p34) target = $region8
    $region5: #{tpu_custom_call.1} parent=1 // loop_body
      %s38 = ssub.s32 %s33, 1
      %s39 = ssub.s32 %s33, 2
      %s40 = sadd.s32 %s33, 1
      %s42 = sadd.s32 %s41, 1
      %p45 = scmp.eq.s32.totalorder %s33, 1
      %p46 = scmp.ne.s32.totalorder %s41, %s43
      %p47 = scmp.eq.s32.totalorder %s33, 0
      %p48 = por %p46, %p47
      %p49 = scmp.ne.s32.totalorder %s41, %s43
      %p50 = scmp.eq.s32.totalorder %s38, 1
      %p51 = por %p49, %p50
      %p52 = scmp.ne.s32.totalorder %s43, %s44
      %p53 = scmp.eq.s32.totalorder %s38, 0
      %p54 = por %p52, %p53
      %p55 = scmp.ne.s32.totalorder %s43, %s44
      %p56 = scmp.eq.s32.totalorder %s39, 1
      %p57 = por %p55, %p56
      %p59 = scmp.ne.s32.totalorder %s44, %s58
      %p60 = scmp.eq.s32.totalorder %s39, 0
      %p61 = por %p59, %p60
      %s63 = sadd.s32 %s62, 1
      %p66 = scmp.eq.s32.totalorder %s33, 1
      %p67 = scmp.ne.s32.totalorder %s62, %s64
      %p68 = scmp.eq.s32.totalorder %s33, 0
      %p69 = por %p67, %p68
      %p70 = scmp.ne.s32.totalorder %s62, %s64
      %p71 = scmp.eq.s32.totalorder %s38, 1
      %p72 = por %p70, %p71
      %p73 = scmp.ne.s32.totalorder %s64, %s65
      %p74 = scmp.eq.s32.totalorder %s38, 0
      %p75 = por %p73, %p74
      %p76 = scmp.ne.s32.totalorder %s64, %s65
      %p77 = scmp.eq.s32.totalorder %s39, 1
      %p78 = por %p76, %p77
      %p80 = scmp.ne.s32.totalorder %s65, %s79
      %p81 = scmp.eq.s32.totalorder %s39, 0
      %p82 = por %p80, %p81
      %s84 = sadd.s32 %s83, 1
      %p87 = scmp.eq.s32.totalorder %s33, 1
      %p88 = scmp.ne.s32.totalorder %s83, %s85
      %p89 = scmp.eq.s32.totalorder %s33, 0
      %p90 = por %p88, %p89
      %p91 = scmp.ne.s32.totalorder %s83, %s85
      %p92 = scmp.eq.s32.totalorder %s38, 1
      %p93 = por %p91, %p92
      %p94 = scmp.ne.s32.totalorder %s85, %s86
      %p95 = scmp.eq.s32.totalorder %s38, 0
      %p96 = por %p94, %p95
      %p97 = scmp.ne.s32.totalorder %s85, %s86
      %p98 = scmp.eq.s32.totalorder %s39, 1
      %p99 = por %p97, %p98
      %p101 = scmp.ne.s32.totalorder %s86, %s100
      %p102 = scmp.eq.s32.totalorder %s39, 0
      %p103 = por %p101, %p102
      %s105 = sadd.s32 %s104, 1
      %p108 = scmp.eq.s32.totalorder %s33, 1
      %p109 = scmp.ne.s32.totalorder %s104, %s106
      %p110 = scmp.eq.s32.totalorder %s33, 0
      %p111 = por %p109, %p110
      %p112 = scmp.ne.s32.totalorder %s104, %s106
      %p113 = scmp.eq.s32.totalorder %s38, 1
      %p114 = por %p112, %p113
      %p115 = scmp.ne.s32.totalorder %s106, %s107
      %p116 = scmp.eq.s32.totalorder %s38, 0
      %p117 = por %p115, %p116
      %p118 = scmp.ne.s32.totalorder %s106, %s107
      %p119 = scmp.eq.s32.totalorder %s39, 1
      %p120 = por %p118, %p119
      %p122 = scmp.ne.s32.totalorder %s107, %s121
      %p123 = scmp.eq.s32.totalorder %s39, 0
      %p124 = por %p122, %p123
      %s126 = sadd.s32 %s125, 1
      %p129 = scmp.eq.s32.totalorder %s33, 1
      %p130 = scmp.ne.s32.totalorder %s125, %s127
      %p131 = scmp.eq.s32.totalorder %s33, 0
      %p132 = por %p130, %p131
      %p133 = scmp.ne.s32.totalorder %s125, %s127
      %p134 = scmp.eq.s32.totalorder %s38, 1
      %p135 = por %p133, %p134
      %p136 = scmp.ne.s32.totalorder %s127, %s128
      %p137 = scmp.eq.s32.totalorder %s38, 0
      %p138 = por %p136, %p137
      %p139 = scmp.ne.s32.totalorder %s127, %s128
      %p140 = scmp.eq.s32.totalorder %s39, 1
      %p141 = por %p139, %p140
      %p143 = scmp.ne.s32.totalorder %s128, %s142
      %p144 = scmp.eq.s32.totalorder %s39, 0
      %p145 = por %p143, %p144
      %s147 = sadd.s32 %s146, 1
      %p150 = scmp.eq.s32.totalorder %s33, 1
      %p151 = scmp.ne.s32.totalorder %s146, %s148
      %p152 = scmp.eq.s32.totalorder %s33, 0
      %p153 = por %p151, %p152
      %p154 = scmp.ne.s32.totalorder %s146, %s148
      %p155 = scmp.eq.s32.totalorder %s38, 1
      %p156 = por %p154, %p155
      %p157 = scmp.ne.s32.totalorder %s148, %s149
      %p158 = scmp.eq.s32.totalorder %s38, 0
      %p159 = por %p157, %p158
      %p160 = scmp.ne.s32.totalorder %s148, %s149
      %p161 = scmp.eq.s32.totalorder %s39, 1
      %p162 = por %p160, %p161
      %p164 = scmp.ne.s32.totalorder %s149, %s163
      %p165 = scmp.eq.s32.totalorder %s39, 0
      %p166 = por %p164, %p165
      %s168 = sadd.s32 %s167, 1
      %p171 = scmp.eq.s32.totalorder %s33, 1
      %p172 = scmp.ne.s32.totalorder %s167, %s169
      %p173 = scmp.eq.s32.totalorder %s33, 0
      %p174 = por %p172, %p173
      %p175 = scmp.ne.s32.totalorder %s167, %s169
      %p176 = scmp.eq.s32.totalorder %s38, 1
      %p177 = por %p175, %p176
      %p178 = scmp.ne.s32.totalorder %s169, %s170
      %p179 = scmp.eq.s32.totalorder %s38, 0
      %p180 = por %p178, %p179
      %p181 = scmp.ne.s32.totalorder %s169, %s170
      %p182 = scmp.eq.s32.totalorder %s39, 1
      %p183 = por %p181, %p182
      %p185 = scmp.ne.s32.totalorder %s170, %s184
      %p186 = scmp.eq.s32.totalorder %s39, 0
      %p187 = por %p185, %p186
      %s189 = sadd.s32 %s188, 1
      %p192 = scmp.eq.s32.totalorder %s33, 1
      %p193 = scmp.ne.s32.totalorder %s188, %s190
      %p194 = scmp.eq.s32.totalorder %s33, 0
      %p195 = por %p193, %p194
      %p196 = scmp.ne.s32.totalorder %s188, %s190
      %p197 = scmp.eq.s32.totalorder %s38, 1
      %p198 = por %p196, %p197
      %p199 = scmp.ne.s32.totalorder %s190, %s191
      %p200 = scmp.eq.s32.totalorder %s38, 0
      %p201 = por %p199, %p200
      %p202 = scmp.ne.s32.totalorder %s190, %s191
      %p203 = scmp.eq.s32.totalorder %s39, 1
      %p204 = por %p202, %p203
      %p206 = scmp.ne.s32.totalorder %s191, %s205
      %p207 = scmp.eq.s32.totalorder %s39, 0
      %p208 = por %p206, %p207
      %s210 = sadd.s32 %s209, 1
      %p213 = scmp.eq.s32.totalorder %s33, 1
      %p214 = scmp.ne.s32.totalorder %s209, %s211
      %p215 = scmp.eq.s32.totalorder %s33, 0
      %p216 = por %p214, %p215
      %p217 = scmp.ne.s32.totalorder %s209, %s211
      %p218 = scmp.eq.s32.totalorder %s38, 1
      %p219 = por %p217, %p218
      %p220 = scmp.ne.s32.totalorder %s211, %s212
      %p221 = scmp.eq.s32.totalorder %s38, 0
      %p222 = por %p220, %p221
      %p223 = scmp.ne.s32.totalorder %s211, %s212
      %p224 = scmp.eq.s32.totalorder %s39, 1
      %p225 = por %p223, %p224
      %p227 = scmp.ne.s32.totalorder %s212, %s226
      %p228 = scmp.eq.s32.totalorder %s39, 0
      %p229 = por %p227, %p228
      %s231 = sadd.s32 %s230, 1
      %p234 = scmp.eq.s32.totalorder %s33, 1
      %p235 = scmp.ne.s32.totalorder %s230, %s232
      %p236 = scmp.eq.s32.totalorder %s33, 0
      %p237 = por %p235, %p236
      %p238 = scmp.ne.s32.totalorder %s230, %s232
      %p239 = scmp.eq.s32.totalorder %s38, 1
      %p240 = por %p238, %p239
      %p241 = scmp.ne.s32.totalorder %s232, %s233
      %p242 = scmp.eq.s32.totalorder %s38, 0
      %p243 = por %p241, %p242
      %p244 = scmp.ne.s32.totalorder %s232, %s233
      %p245 = scmp.eq.s32.totalorder %s39, 1
      %p246 = por %p244, %p245
      %p248 = scmp.ne.s32.totalorder %s233, %s247
      %p249 = scmp.eq.s32.totalorder %s39, 0
      %p250 = por %p248, %p249
      %s252 = sadd.s32 %s251, 1
      %p255 = scmp.eq.s32.totalorder %s33, 1
      %p256 = scmp.ne.s32.totalorder %s251, %s253
      %p257 = scmp.eq.s32.totalorder %s33, 0
      %p258 = por %p256, %p257
      %p259 = scmp.ne.s32.totalorder %s251, %s253
      %p260 = scmp.eq.s32.totalorder %s38, 1
      %p261 = por %p259, %p260
      %p262 = scmp.ne.s32.totalorder %s253, %s254
      %p263 = scmp.eq.s32.totalorder %s38, 0
      %p264 = por %p262, %p263
      %p265 = scmp.ne.s32.totalorder %s253, %s254
      %p266 = scmp.eq.s32.totalorder %s39, 1
      %p267 = por %p265, %p266
      %p269 = scmp.ne.s32.totalorder %s254, %s268
      %p270 = scmp.eq.s32.totalorder %s39, 0
      %p271 = por %p269, %p270
      %s273 = sadd.s32 %s272, 1
      %p276 = scmp.eq.s32.totalorder %s33, 1
      %p277 = scmp.ne.s32.totalorder %s272, %s274
      %p278 = scmp.eq.s32.totalorder %s33, 0
      %p279 = por %p277, %p278
      %p280 = scmp.ne.s32.totalorder %s272, %s274
      %p281 = scmp.eq.s32.totalorder %s38, 1
      %p282 = por %p280, %p281
      %p283 = scmp.ne.s32.totalorder %s274, %s275
      %p284 = scmp.eq.s32.totalorder %s38, 0
      %p285 = por %p283, %p284
      %p286 = scmp.ne.s32.totalorder %s274, %s275
      %p287 = scmp.eq.s32.totalorder %s39, 1
      %p288 = por %p286, %p287
      %p290 = scmp.ne.s32.totalorder %s275, %s289
      %p291 = scmp.eq.s32.totalorder %s39, 0
      %p292 = por %p290, %p291
      %s294 = sadd.s32 %s293, 1
      %p297 = scmp.eq.s32.totalorder %s33, 1
      %p298 = scmp.ne.s32.totalorder %s293, %s295
      %p299 = scmp.eq.s32.totalorder %s33, 0
      %p300 = por %p298, %p299
      %p301 = scmp.ne.s32.totalorder %s293, %s295
      %p302 = scmp.eq.s32.totalorder %s38, 1
      %p303 = por %p301, %p302
      %p304 = scmp.ne.s32.totalorder %s295, %s296
      %p305 = scmp.eq.s32.totalorder %s38, 0
      %p306 = por %p304, %p305
      %p307 = scmp.ne.s32.totalorder %s295, %s296
      %p308 = scmp.eq.s32.totalorder %s39, 1
      %p309 = por %p307, %p308
      %p311 = scmp.ne.s32.totalorder %s296, %s310
      %p312 = scmp.eq.s32.totalorder %s39, 0
      %p313 = por %p311, %p312
      %s315 = sadd.s32 %s314, 1
      %p318 = scmp.eq.s32.totalorder %s33, 1
      %p319 = scmp.ne.s32.totalorder %s314, %s316
      %p320 = scmp.eq.s32.totalorder %s33, 0
      %p321 = por %p319, %p320
      %p322 = scmp.ne.s32.totalorder %s314, %s316
      %p323 = scmp.eq.s32.totalorder %s38, 1
      %p324 = por %p322, %p323
      %p325 = scmp.ne.s32.totalorder %s316, %s317
      %p326 = scmp.eq.s32.totalorder %s38, 0
      %p327 = por %p325, %p326
      %p328 = scmp.ne.s32.totalorder %s316, %s317
      %p329 = scmp.eq.s32.totalorder %s39, 1
      %p330 = por %p328, %p329
      %p332 = scmp.ne.s32.totalorder %s317, %s331
      %p333 = scmp.eq.s32.totalorder %s39, 0
      %p334 = por %p332, %p333
      %s336 = sadd.s32 %s335, 1
      %p339 = scmp.eq.s32.totalorder %s33, 1
      %p340 = scmp.ne.s32.totalorder %s335, %s337
      %p341 = scmp.eq.s32.totalorder %s33, 0
      %p342 = por %p340, %p341
      %p343 = scmp.ne.s32.totalorder %s335, %s337
      %p344 = scmp.eq.s32.totalorder %s38, 1
      %p345 = por %p343, %p344
      %p346 = scmp.ne.s32.totalorder %s337, %s338
      %p347 = scmp.eq.s32.totalorder %s38, 0
      %p348 = por %p346, %p347
      %p349 = scmp.ne.s32.totalorder %s337, %s338
      %p350 = scmp.eq.s32.totalorder %s39, 1
      %p351 = por %p349, %p350
      %p353 = scmp.ne.s32.totalorder %s338, %s352
      %p354 = scmp.eq.s32.totalorder %s39, 0
      %p355 = por %p353, %p354
      %s356 = ssub.s32 %s33, %s40
      %p357 = scmp.eq.s32.totalorder %s356, 0
      %s359 = sadd.s32 %s358, 1
      %s360 = scalar_select %p357, %s358, %s359
      %p363 = pneg %p357
      %p364 = scmp.eq.s32.totalorder %s33, 1
      %p365 = por %p363, %p364
      %p366 = scmp.ne.s32.totalorder %s358, %s361
      %p367 = scmp.eq.s32.totalorder %s33, 0
      %p368 = por %p366, %p367
      %p369 = scmp.ne.s32.totalorder %s358, %s361
      %p370 = scmp.eq.s32.totalorder %s38, 1
      %p371 = por %p369, %p370
      %p372 = scmp.ne.s32.totalorder %s361, %s362
      %p373 = scmp.eq.s32.totalorder %s38, 0
      %p374 = por %p372, %p373
      %p375 = scmp.ne.s32.totalorder %s361, %s362
      %p376 = scmp.eq.s32.totalorder %s39, 1
      %p377 = por %p375, %p376
      %p379 = scmp.ne.s32.totalorder %s362, %s378
      %p380 = scmp.eq.s32.totalorder %s39, 0
      %p381 = por %p379, %p380
      %p382 = scmp.le.s32.totalorder 1, %s33
      %p383 = scmp.lt.s32.totalorder %s33, 3
      %p384 = pnand %p382, %p383
      %p385 = pneg %p384
      // Predicated region
      $region9: #{tpu_custom_call.1} parent=5 // pred_check
        _
      $region10: #{tpu_custom_call.1} parent=5 // pred_check_branch
        %387 = sbr.rel (%p384) target = $region12
      $region11: #{tpu_custom_call.1} parent=5 // pred_region
        %s388 = ssub.s32 %s33, 1
        // Predicated region
        $region13: #{tpu_custom_call.1} parent=11 // pred_check
          %p389 = pneg %p54
        $region14: #{tpu_custom_call.1} parent=11 // pred_check_branch
          %391 = sbr.rel (%p389) target = $region16
        $region15: #{tpu_custom_call.1} parent=11 // pred_region
          _
        $region16: #{tpu_custom_call.1} parent=11 // pred_fallthru
          _
        // Predicated region
        $region17: #{tpu_custom_call.1} parent=11 // pred_check
          %p392 = pneg %p75
        $region18: #{tpu_custom_call.1} parent=11 // pred_check_branch
          %394 = sbr.rel (%p392) target = $region20
        $region19: #{tpu_custom_call.1} parent=11 // pred_region
          _
        $region20: #{tpu_custom_call.1} parent=11 // pred_fallthru
          _
        // Predicated region
        $region21: #{tpu_custom_call.1} parent=11 // pred_check
          %p395 = pneg %p96
        $region22: #{tpu_custom_call.1} parent=11 // pred_check_branch
          %397 = sbr.rel (%p395) target = $region24
        $region23: #{tpu_custom_call.1} parent=11 // pred_region
          _
        $region24: #{tpu_custom_call.1} parent=11 // pred_fallthru
          _
        // Predicated region
        $region25: #{tpu_custom_call.1} parent=11 // pred_check
          %p398 = pneg %p117
        $region26: #{tpu_custom_call.1} parent=11 // pred_check_branch
          %400 = sbr.rel (%p398) target = $region28
        $region27: #{tpu_custom_call.1} parent=11 // pred_region
          _
        $region28: #{tpu_custom_call.1} parent=11 // pred_fallthru
          _
        // Predicated region
        $region29: #{tpu_custom_call.1} parent=11 // pred_check
          %p401 = pneg %p138
        $region30: #{tpu_custom_call.1} parent=11 // pred_check_branch
          %403 = sbr.rel (%p401) target = $region32
        $region31: #{tpu_custom_call.1} parent=11 // pred_region
          _
        $region32: #{tpu_custom_call.1} parent=11 // pred_fallthru
          _
        // Predicated region
        $region33: #{tpu_custom_call.1} parent=11 // pred_check
          %p404 = pneg %p159
        $region34: #{tpu_custom_call.1} parent=11 // pred_check_branch
          %406 = sbr.rel (%p404) target = $region36
        $region35: #{tpu_custom_call.1} parent=11 // pred_region
          _
        $region36: #{tpu_custom_call.1} parent=11 // pred_fallthru
          _
        // Predicated region
        $region37: #{tpu_custom_call.1} parent=11 // pred_check
          %p407 = pneg %p180
        $region38: #{tpu_custom_call.1} parent=11 // pred_check_branch
          %409 = sbr.rel (%p407) target = $region40
        $region39: #{tpu_custom_call.1} parent=11 // pred_region
          _
        $region40: #{tpu_custom_call.1} parent=11 // pred_fallthru
          _
        // Predicated region
        $region41: #{tpu_custom_call.1} parent=11 // pred_check
          %p410 = pneg %p201
        $region42: #{tpu_custom_call.1} parent=11 // pred_check_branch
          %412 = sbr.rel (%p410) target = $region44
        $region43: #{tpu_custom_call.1} parent=11 // pred_region
          _
        $region44: #{tpu_custom_call.1} parent=11 // pred_fallthru
          _
        // Predicated region
        $region45: #{tpu_custom_call.1} parent=11 // pred_check
          %p413 = pneg %p222
        $region46: #{tpu_custom_call.1} parent=11 // pred_check_branch
          %415 = sbr.rel (%p413) target = $region48
        $region47: #{tpu_custom_call.1} parent=11 // pred_region
          _
        $region48: #{tpu_custom_call.1} parent=11 // pred_fallthru
          _
        // Predicated region
        $region49: #{tpu_custom_call.1} parent=11 // pred_check
          %p416 = pneg %p243
        $region50: #{tpu_custom_call.1} parent=11 // pred_check_branch
          %418 = sbr.rel (%p416) target = $region52
        $region51: #{tpu_custom_call.1} parent=11 // pred_region
          _
        $region52: #{tpu_custom_call.1} parent=11 // pred_fallthru
          _
        // Predicated region
        $region53: #{tpu_custom_call.1} parent=11 // pred_check
          %p419 = pneg %p264
        $region54: #{tpu_custom_call.1} parent=11 // pred_check_branch
          %421 = sbr.rel (%p419) target = $region56
        $region55: #{tpu_custom_call.1} parent=11 // pred_region
          _
        $region56: #{tpu_custom_call.1} parent=11 // pred_fallthru
          _
        // Predicated region
        $region57: #{tpu_custom_call.1} parent=11 // pred_check
          %p422 = pneg %p285
        $region58: #{tpu_custom_call.1} parent=11 // pred_check_branch
          %424 = sbr.rel (%p422) target = $region60
        $region59: #{tpu_custom_call.1} parent=11 // pred_region
          _
        $region60: #{tpu_custom_call.1} parent=11 // pred_fallthru
          _
        // Predicated region
        $region61: #{tpu_custom_call.1} parent=11 // pred_check
          %p425 = pneg %p306
        $region62: #{tpu_custom_call.1} parent=11 // pred_check_branch
          %427 = sbr.rel (%p425) target = $region64
        $region63: #{tpu_custom_call.1} parent=11 // pred_region
          _
        $region64: #{tpu_custom_call.1} parent=11 // pred_fallthru
          _
        // Predicated region
        $region65: #{tpu_custom_call.1} parent=11 // pred_check
          %p428 = pneg %p327
        $region66: #{tpu_custom_call.1} parent=11 // pred_check_branch
          %430 = sbr.rel (%p428) target = $region68
        $region67: #{tpu_custom_call.1} parent=11 // pred_region
          _
        $region68: #{tpu_custom_call.1} parent=11 // pred_fallthru
          _
        // Predicated region
        $region69: #{tpu_custom_call.1} parent=11 // pred_check
          %p431 = pneg %p348
        $region70: #{tpu_custom_call.1} parent=11 // pred_check_branch
          %433 = sbr.rel (%p431) target = $region72
        $region71: #{tpu_custom_call.1} parent=11 // pred_region
          _
        $region72: #{tpu_custom_call.1} parent=11 // pred_fallthru
          _
      $region12: #{tpu_custom_call.1} parent=5 // pred_fallthru
        _
      %p434 = scmp.lt.s32.totalorder %s33, 2
      // Predicated region
      $region73: #{tpu_custom_call.1} parent=5 // pred_check
        %p435 = pneg %p434
      $region74: #{tpu_custom_call.1} parent=5 // pred_check_branch
        %437 = sbr.rel (%p435) target = $region76
      $region75: #{tpu_custom_call.1} parent=5 // pred_region
        _
      $region76: #{tpu_custom_call.1} parent=5 // pred_fallthru
        _
      %p438 = scmp.le.s32.totalorder 1, %s33
      %p439 = scmp.lt.s32.totalorder %s33, 3
      %p440 = pnand %p438, %p439
      %p441 = pneg %p440
      // Predicated region
      $region77: #{tpu_custom_call.1} parent=5 // pred_check
        _
      $region78: #{tpu_custom_call.1} parent=5 // pred_check_branch
        %443 = sbr.rel (%p440) target = $region80
      $region79: #{tpu_custom_call.1} parent=5 // pred_region
        %s444 = ssub.s32 %s33, 1
        %p445 = pneg %p54
        %p446 = pneg %p51
        %p447 = pneg %p75
        %p448 = pneg %p72
        %p449 = pneg %p96
        %p450 = pneg %p93
        %p451 = pneg %p117
        %p452 = pneg %p114
        %p453 = pneg %p138
        %p454 = pneg %p135
        %p455 = pneg %p159
        %p456 = pneg %p156
        %p457 = pneg %p180
        %p458 = pneg %p177
        %p459 = pneg %p201
        %p460 = pneg %p198
        %p461 = pneg %p222
        %p462 = pneg %p219
        %p463 = pneg %p243
        %p464 = pneg %p240
        %p465 = pneg %p264
        %p466 = pneg %p261
        %p467 = pneg %p285
        %p468 = pneg %p282
        %p469 = pneg %p306
        %p470 = pneg %p303
        %p471 = pneg %p327
        %p472 = pneg %p324
        %p473 = pneg %p348
        %p474 = pneg %p345
        %p475 = pneg %p374
        %p476 = pneg %p371
        %s477 = sand.u32 %s361, 1
        %s478 = scalar_lea.sflag [#allocation6], %s477
        %s479 = sand.u32 %s361, 1
        %s480 = smul.addr %s479, 8
        %s481 = scalar_lea.vmem [#allocation5], %s480
        %s483 = smul.u32 %s38, 8
        %s484 = sld [smem:[#allocation4 + %s483]]
        %s485 = scalar_lea.vmem %s1, %s484
        %v486 = vld [vmem:[%s485] sm:$0x1]
        %vm487 = vcmask 253952
        %488 = vst.msk [vmem:[#allocation2] sm:$0x1] %vm487, %v486
        %s489 = sadd.s32 %s483, 1
        %s490 = sld [smem:[#allocation4 + %s489]]
        %s491 = scalar_lea.vmem %s1, %s490
        %v492 = vld [vmem:[%s491] sm:$0x1]
        %493 = vst.msk [vmem:[#allocation2 + $0x1] sm:$0x1] %vm487, %v492
        %s494 = sadd.s32 %s483, 2
        %s495 = sld [smem:[#allocation4 + %s494]]
        %s496 = scalar_lea.vmem %s1, %s495
        %v497 = vld [vmem:[%s496] sm:$0x1]
        %498 = vst.msk [vmem:[#allocation2 + $0x2] sm:$0x1] %vm487, %v497
        %s499 = sadd.s32 %s483, 3
        %s500 = sld [smem:[#allocation4 + %s499]]
        %s501 = scalar_lea.vmem %s1, %s500
        %v502 = vld [vmem:[%s501] sm:$0x1]
        %503 = vst.msk [vmem:[#allocation2 + $0x3] sm:$0x1] %vm487, %v502
        %s504 = sadd.s32 %s483, 4
        %s505 = sld [smem:[#allocation4 + %s504]]
        %s506 = scalar_lea.vmem %s1, %s505
        %v507 = vld [vmem:[%s506] sm:$0x1]
        %508 = vst.msk [vmem:[#allocation2 + $0x4] sm:$0x1] %vm487, %v507
        %s509 = sadd.s32 %s483, 5
        %s510 = sld [smem:[#allocation4 + %s509]]
        %s511 = scalar_lea.vmem %s1, %s510
        %v512 = vld [vmem:[%s511] sm:$0x1]
        %513 = vst.msk [vmem:[#allocation2 + $0x5] sm:$0x1] %vm487, %v512
        %s514 = sadd.s32 %s483, 6
        %s515 = sld [smem:[#allocation4 + %s514]]
        %s516 = scalar_lea.vmem %s1, %s515
        %v517 = vld [vmem:[%s516] sm:$0x1]
        %518 = vst.msk [vmem:[#allocation2 + $0x6] sm:$0x1] %vm487, %v517
        %s519 = sadd.s32 %s483, 7
        %s520 = sld [smem:[#allocation4 + %s519]]
        %s521 = scalar_lea.vmem %s1, %s520
        %v522 = vld [vmem:[%s521] sm:$0x1]
        %523 = vst.msk [vmem:[#allocation2 + $0x7] sm:$0x1] %vm487, %v522
        %v524 = vld [vmem:[#allocation2] sm:$0xff]
        %v525 = vld [vmem:[%s2] sm:$0xff]
        %v526 = vadd.f32 %v524, %v525
        %v527 = vlaneseq
        %v528 = vshrl.u32 %v527, 7
        %v529 = vlaneseq
        %v530 = vand.u32 %v529, 127
        %vm531 = vcmp.gt.s32.totalorder %v530, %v528
        %v532 = vsel %vm531, -1e+30, 0.0
        %v533 = vpack.c.bf16 %v526, %v526
        %v534 = vld [vmem:[%s3] sm:$0xf]
        %v535 = vld [vmem:[%s3 + $0x4] sm:$0xf]
        %v536 = vld [vmem:[%s3 + $0x8] sm:$0xf]
        %v537 = vld [vmem:[%s3 + $0xc] sm:$0xf]
        %v542 = vunpack.c.l.b16 %v534
        %v543 = vunpack.c.l.b16 %v535
        %v544 = vunpack.c.l.b16 %v536
        %v545 = vunpack.c.l.b16 %v537
        %v546 = vpack.c.b16 %v543, %v542
        %v547 = vpack.c.b16 %v545, %v544
        %vm550 = vcmask 261120
        %v552 = vsel %vm550, %v533, 0
        %554 = vmatpush.bf16.msra.mxu0 0
        %555 = vmatpush.bf16.msra.mxu0 0
        %556 = vmatpush.bf16.msra.mxu0 0
        %557 = vmatpush.bf16.msra.mxu0 0
        %558 = vmatpush.bf16.msra.mxu0 0
        %559 = vmatpush.bf16.msra.mxu0 0
        %560 = vmatpush.bf16.msra.mxu0 %v547
        %561 = vmatpush.bf16.msra.mxu0 %v546
        %562 = vmatmul.bf16.gmra.mxu0 %v552
        %v563 = vpop.f32.mrf.mxu0
        %v564 = vadd.f32 0.0, %v563
        %v565 = vpop.f32.mrf.mxu0
        %566 = vdwg.mxu0
        %v567 = vpack.c.bf16 %v564, %v564
        %569 = vrot.lane.b32.xlu0 %v567, 120
        %v570 = vpop.permute.xlu0 %569
        %571 = vrot.lane.b32.xlu0 %v567, 112
        %v572 = vpop.permute.xlu0 %571
        %573 = vrot.lane.b32.xlu0 %v567, 104
        %v574 = vpop.permute.xlu0 %573
        %v575 = vunpack.c.l.b16 %v567
        %v576 = vpack.c.b16 %v575, %v575
        %577 = vrot.lane.b32.xlu0 %v576, 96
        %v578 = vpop.permute.xlu0 %577
        %vm579 = vcmask 64512
        %v581 = vsel %vm579, %v567, 0
        %v584 = vsel %vm579, %v578, 0
        %586 = vmatpush.bf16.xpose.msra.mxu0 0
        %587 = vmatpush.bf16.xpose.msra.mxu0 0
        %588 = vmatpush.bf16.xpose.msra.mxu0 0
        %589 = vmatpush.bf16.xpose.msra.mxu0 0
        %590 = vmatpush.bf16.xpose.msra.mxu0 0
        %591 = vmatpush.bf16.xpose.msra.mxu0 0
        %592 = vmatpush.bf16.xpose.msra.mxu0 0
        %593 = vmatpush.bf16.xpose.msra.mxu0 %v584
        %594 = vmatmul.bf16.gmra.mxu0 %v581
        %v595 = vpop.f32.mrf.mxu0
        %v596 = vadd.f32 %v532, %v595
        %v597 = vpop.f32.mrf.mxu0
        %598 = vdwg.mxu0
        %v599 = vunpack.c.l.b16 %v570
        %v600 = vpack.c.b16 %v599, %v599
        %601 = vrot.lane.b32.xlu0 %v600, 96
        %v602 = vpop.permute.xlu0 %601
        %v604 = vsel %vm579, %v570, 0
        %v607 = vsel %vm579, %v602, 0
        %609 = vmatpush.bf16.xpose.msra.mxu0 0
        %610 = vmatpush.bf16.xpose.msra.mxu0 0
        %611 = vmatpush.bf16.xpose.msra.mxu0 0
        %612 = vmatpush.bf16.xpose.msra.mxu0 0
        %613 = vmatpush.bf16.xpose.msra.mxu0 0
        %614 = vmatpush.bf16.xpose.msra.mxu0 0
        %615 = vmatpush.bf16.xpose.msra.mxu0 0
        %616 = vmatpush.bf16.xpose.msra.mxu0 %v607
        %617 = vmatmul.bf16.gmra.mxu0 %v604
        %v618 = vpop.f32.mrf.mxu0
        %v619 = vadd.f32 %v532, %v618
        %v620 = vpop.f32.mrf.mxu0
        %621 = vdwg.mxu0
        %v622 = vunpack.c.l.b16 %v572
        %v623 = vpack.c.b16 %v622, %v622
        %624 = vrot.lane.b32.xlu0 %v623, 96
        %v625 = vpop.permute.xlu0 %624
        %v627 = vsel %vm579, %v572, 0
        %v630 = vsel %vm579, %v625, 0
        %632 = vmatpush.bf16.xpose.msra.mxu0 0
        %633 = vmatpush.bf16.xpose.msra.mxu0 0
        %634 = vmatpush.bf16.xpose.msra.mxu0 0
        %635 = vmatpush.bf16.xpose.msra.mxu0 0
        %636 = vmatpush.bf16.xpose.msra.mxu0 0
        %637 = vmatpush.bf16.xpose.msra.mxu0 0
        %638 = vmatpush.bf16.xpose.msra.mxu0 0
        %639 = vmatpush.bf16.xpose.msra.mxu0 %v630
        %640 = vmatmul.bf16.gmra.mxu0 %v627
        %v641 = vpop.f32.mrf.mxu0
        %v642 = vadd.f32 %v532, %v641
        %v643 = vpop.f32.mrf.mxu0
        %644 = vdwg.mxu0
        %v645 = vunpack.c.l.b16 %v574
        %v646 = vpack.c.b16 %v645, %v645
        %647 = vrot.lane.b32.xlu0 %v646, 96
        %v648 = vpop.permute.xlu0 %647
        %v650 = vsel %vm579, %v574, 0
        %v653 = vsel %vm579, %v648, 0
        %655 = vmatpush.bf16.xpose.msra.mxu0 0
        %656 = vmatpush.bf16.xpose.msra.mxu0 0
        %657 = vmatpush.bf16.xpose.msra.mxu0 0
        %658 = vmatpush.bf16.xpose.msra.mxu0 0
        %659 = vmatpush.bf16.xpose.msra.mxu0 0
        %660 = vmatpush.bf16.xpose.msra.mxu0 0
        %661 = vmatpush.bf16.xpose.msra.mxu0 0
        %662 = vmatpush.bf16.xpose.msra.mxu0 %v653
        %663 = vmatmul.bf16.gmra.mxu0 %v650
        %v664 = vpop.f32.mrf.mxu0
        %v665 = vadd.f32 %v532, %v664
        %v666 = vpop.f32.mrf.mxu0
        %667 = vdwg.mxu0
        %v668 = vsel %vm579, %v596, -inf
        %669 = vmax.xlane.f32.xlu0 %v668
        %v670 = vpop.xlane.xlu0 %669
        %v671 = vsel %vm579, %v619, -inf
        %672 = vmax.xlane.f32.xlu0 %v671
        %v673 = vpop.xlane.xlu0 %672
        %v674 = vsel %vm579, %v642, -inf
        %675 = vmax.xlane.f32.xlu0 %v674
        %v676 = vpop.xlane.xlu0 %675
        %v677 = vsel %vm579, %v665, -inf
        %678 = vmax.xlane.f32.xlu0 %v677
        %v679 = vpop.xlane.xlu0 %678
        %v680 = vsub.f32 %v596, %v670
        %v681 = vsub.f32 %v619, %v673
        %v682 = vsub.f32 %v642, %v676
        %v683 = vsub.f32 %v665, %v679
        %v684 = vmul.f32 %v680, 1.442695
        %v685 = vpow.pop %v684
        %v686 = vmul.f32 %v681, 1.442695
        %v687 = vpow.pop %v686
        %v688 = vmul.f32 %v682, 1.442695
        %v689 = vpow.pop %v688
        %v690 = vmul.f32 %v683, 1.442695
        %v691 = vpow.pop %v690
        %v692 = vsel %vm579, %v685, 0.0
        %693 = vadd.xlane.f32.xlu0 %v692
        %v694 = vpop.xlane.xlu0 %693
        %v695 = vsel %vm579, %v687, 0.0
        %696 = vadd.xlane.f32.xlu0 %v695
        %v697 = vpop.xlane.xlu0 %696
        %v698 = vsel %vm579, %v689, 0.0
        %699 = vadd.xlane.f32.xlu0 %v698
        %v700 = vpop.xlane.xlu0 %699
        %v701 = vsel %vm579, %v691, 0.0
        %702 = vadd.xlane.f32.xlu0 %v701
        %v703 = vpop.xlane.xlu0 %702
        %v704 = vrcp.pop %v694
        %v705 = vrcp.pop %v697
        %v706 = vrcp.pop %v700
        %v707 = vrcp.pop %v703
        %v708 = vmul.f32 %v685, %v704
        %v709 = vmul.f32 %v687, %v705
        %v710 = vmul.f32 %v689, %v706
        %v711 = vmul.f32 %v691, %v707
        %v712 = vpack.c.bf16 %v708, %v708
        %v713 = vpack.c.bf16 %v709, %v709
        %v714 = vpack.c.bf16 %v710, %v710
        %v715 = vpack.c.bf16 %v711, %v711
        %716 = vrot.lane.b32.xlu0 %v576, 64
        %v717 = vpop.permute.xlu0 %716
        %v719 = vsel %vm579, %v712, 0
        %vm721 = vcmask 1043456
        %v723 = vsel %vm721, %v717, 0
        %725 = vmatpush.bf16.msra.mxu0 0
        %726 = vmatpush.bf16.msra.mxu0 0
        %727 = vmatpush.bf16.msra.mxu0 0
        %728 = vmatpush.bf16.msra.mxu0 0
        %729 = vmatpush.bf16.msra.mxu0 0
        %730 = vmatpush.bf16.msra.mxu0 0
        %731 = vmatpush.bf16.msra.mxu0 0
        %732 = vmatpush.bf16.msra.mxu0 %v723
        %733 = vmatmul.bf16.gmra.mxu0 %v719
        %v734 = vpop.f32.mrf.mxu0
        %v735 = vadd.f32 0.0, %v734
        %v736 = vpop.f32.mrf.mxu0
        %737 = vdwg.mxu0
        %738 = vrot.lane.b32.xlu0 %v600, 64
        %v739 = vpop.permute.xlu0 %738
        %v741 = vsel %vm579, %v713, 0
        %v744 = vsel %vm721, %v739, 0
        %746 = vmatpush.bf16.msra.mxu0 0
        %747 = vmatpush.bf16.msra.mxu0 0
        %748 = vmatpush.bf16.msra.mxu0 0
        %749 = vmatpush.bf16.msra.mxu0 0
        %750 = vmatpush.bf16.msra.mxu0 0
        %751 = vmatpush.bf16.msra.mxu0 0
        %752 = vmatpush.bf16.msra.mxu0 0
        %753 = vmatpush.bf16.msra.mxu0 %v744
        %754 = vmatmul.bf16.gmra.mxu0 %v741
        %v755 = vpop.f32.mrf.mxu0
        %v756 = vadd.f32 0.0, %v755
        %v757 = vpop.f32.mrf.mxu0
        %758 = vdwg.mxu0
        %759 = vrot.lane.b32.xlu0 %v623, 64
        %v760 = vpop.permute.xlu0 %759
        %v762 = vsel %vm579, %v714, 0
        %v765 = vsel %vm721, %v760, 0
        %767 = vmatpush.bf16.msra.mxu0 0
        %768 = vmatpush.bf16.msra.mxu0 0
        %769 = vmatpush.bf16.msra.mxu0 0
        %770 = vmatpush.bf16.msra.mxu0 0
        %771 = vmatpush.bf16.msra.mxu0 0
        %772 = vmatpush.bf16.msra.mxu0 0
        %773 = vmatpush.bf16.msra.mxu0 0
        %774 = vmatpush.bf16.msra.mxu0 %v765
        %775 = vmatmul.bf16.gmra.mxu0 %v762
        %v776 = vpop.f32.mrf.mxu0
        %v777 = vadd.f32 0.0, %v776
        %v778 = vpop.f32.mrf.mxu0
        %779 = vdwg.mxu0
        %780 = vrot.lane.b32.xlu0 %v646, 64
        %v781 = vpop.permute.xlu0 %780
        %v783 = vsel %vm579, %v715, 0
        %v786 = vsel %vm721, %v781, 0
        %788 = vmatpush.bf16.msra.mxu0 0
        %789 = vmatpush.bf16.msra.mxu0 0
        %790 = vmatpush.bf16.msra.mxu0 0
        %791 = vmatpush.bf16.msra.mxu0 0
        %792 = vmatpush.bf16.msra.mxu0 0
        %793 = vmatpush.bf16.msra.mxu0 0
        %794 = vmatpush.bf16.msra.mxu0 0
        %795 = vmatpush.bf16.msra.mxu0 %v786
        %796 = vmatmul.bf16.gmra.mxu0 %v783
        %v797 = vpop.f32.mrf.mxu0
        %v798 = vadd.f32 0.0, %v797
        %v799 = vpop.f32.mrf.mxu0
        %800 = vdwg.mxu0
        %v801 = vpack.c.bf16 %v735, %v735
        %v802 = vpack.c.bf16 %v756, %v756
        %v803 = vpack.c.bf16 %v777, %v777
        %v804 = vpack.c.bf16 %v798, %v798
        %v805 = vld [vmem:[%s4] sm:$0xf]
        %v806 = vld [vmem:[%s4 + $0x4] sm:$0xf]
        %v807 = vld [vmem:[%s4 + $0x8] sm:$0xf]
        %v808 = vld [vmem:[%s4 + $0xc] sm:$0xf]
        %v810 = vsel %vm579, %v801, 0
        %v813 = vsel %vm721, %v805, 0
        %815 = vmatpush.bf16.msra.mxu0 0
        %816 = vmatpush.bf16.msra.mxu0 0
        %817 = vmatpush.bf16.msra.mxu0 0
        %818 = vmatpush.bf16.msra.mxu0 0
        %819 = vmatpush.bf16.msra.mxu0 0
        %820 = vmatpush.bf16.msra.mxu0 0
        %821 = vmatpush.bf16.msra.mxu0 0
        %822 = vmatpush.bf16.msra.mxu0 %v813
        %823 = vmatmul.bf16.gmra.mxu0 %v810
        %v824 = vpop.f32.mrf.mxu0
        %v825 = vadd.f32 0.0, %v824
        %v826 = vpop.f32.mrf.mxu0
        %827 = vdwg.mxu0
        %v829 = vsel %vm579, %v802, 0
        %v832 = vsel %vm721, %v806, 0
        %834 = vmatpush.bf16.msra.mxu0 0
        %835 = vmatpush.bf16.msra.mxu0 0
        %836 = vmatpush.bf16.msra.mxu0 0
        %837 = vmatpush.bf16.msra.mxu0 0
        %838 = vmatpush.bf16.msra.mxu0 0
        %839 = vmatpush.bf16.msra.mxu0 0
        %840 = vmatpush.bf16.msra.mxu0 0
        %841 = vmatpush.bf16.msra.mxu0 %v832
        %842 = vmatmul.bf16.gmra.mxu0 %v829
        %v843 = vpop.f32.mrf.mxu0
        %v844 = vadd.f32 0.0, %v843
        %v845 = vpop.f32.mrf.mxu0
        %846 = vdwg.mxu0
        %v848 = vsel %vm579, %v803, 0
        %v851 = vsel %vm721, %v807, 0
        %853 = vmatpush.bf16.msra.mxu0 0
        %854 = vmatpush.bf16.msra.mxu0 0
        %855 = vmatpush.bf16.msra.mxu0 0
        %856 = vmatpush.bf16.msra.mxu0 0
        %857 = vmatpush.bf16.msra.mxu0 0
        %858 = vmatpush.bf16.msra.mxu0 0
        %859 = vmatpush.bf16.msra.mxu0 0
        %860 = vmatpush.bf16.msra.mxu0 %v851
        %861 = vmatmul.bf16.gmra.mxu0 %v848
        %v862 = vpop.f32.mrf.mxu0
        %v863 = vadd.f32 0.0, %v862
        %v864 = vpop.f32.mrf.mxu0
        %865 = vdwg.mxu0
        %v867 = vsel %vm579, %v804, 0
        %v870 = vsel %vm721, %v808, 0
        %872 = vmatpush.bf16.msra.mxu0 0
        %873 = vmatpush.bf16.msra.mxu0 0
        %874 = vmatpush.bf16.msra.mxu0 0
        %875 = vmatpush.bf16.msra.mxu0 0
        %876 = vmatpush.bf16.msra.mxu0 0
        %877 = vmatpush.bf16.msra.mxu0 0
        %878 = vmatpush.bf16.msra.mxu0 0
        %879 = vmatpush.bf16.msra.mxu0 %v870
        %880 = vmatmul.bf16.gmra.mxu0 %v867
        %v881 = vpop.f32.mrf.mxu0
        %v882 = vadd.f32 0.0, %v881
        %v883 = vpop.f32.mrf.mxu0
        %884 = vdwg.mxu0
        %v885 = vsel %vm550, %v825, 0.0
        %v886 = vsel %vm550, %v844, 0.0
        %v887 = vadd.f32 %v885, %v886
        %v888 = vsel %vm550, %v863, 0.0
        %v889 = vadd.f32 %v887, %v888
        %v890 = vsel %vm550, %v882, 0.0
        %v891 = vadd.f32 %v889, %v890
        %v892 = vld [vmem:[%s5] sm:$0x1]
        %v894 = vperm.slane %v892, 0
        %v896 = vadd.f32 %v891, %v894
        %v897 = vadd.f32 %v896, %v526
        %v898 = vld [vmem:[%s6] sm:$0x1]
        %v899 = vld [vmem:[%s7] sm:$0x1]
        %v900 = vsel %vm550, %v897, 0.0
        %901 = vadd.xlane.f32.xlu0 %v900
        %v902 = vpop.xlane.xlu0 %901
        %v903 = vrcp.pop 32.0
        %v904 = vmul.f32 32.0, %v903
        %v905 = vsub.f32 1.0, %v904
        %v906 = vmul.f32 %v903, %v905
        %v907 = vadd.f32 %v903, %v906
        %vm908 = vweird.f32 %v903
        %v909 = vsel %vm908, %v903, %v907
        %v910 = vmul.f32 %v902, %v909
        %v911 = vsub.f32 %v897, %v910
        %v912 = vmul.f32 %v911, %v911
        %v913 = vsel %vm550, %v912, 0.0
        %914 = vadd.xlane.f32.xlu0 %v913
        %v915 = vpop.xlane.xlu0 %914
        %v916 = vmul.f32 %v915, %v909
        %v917 = vadd.f32 %v916, 1e-05
        %v918 = vrsqrt.pop %v917
        %v919 = vmul.f32 %v918, %v917
        %v920 = vmul.f32 %v919, %v918
        %v921 = vmul.f32 0.5, %v920
        %v922 = vsub.f32 1.5, %v921
        %v923 = vmul.f32 %v918, %v922
        %vm924 = vweird.f32 %v917
        %vm925 = vweird.f32 %v918
        %vm926 = vmor %vm924, %vm925
        %v927 = vsel %vm926, %v918, %v923
        %v928 = vmul.f32 %v911, %v927
        %v930 = vperm.slane %v898, 0
        %v932 = vmul.f32 %v928, %v930
        %v934 = vperm.slane %v899, 0
        %v936 = vadd.f32 %v932, %v934
        %v937 = vpack.c.bf16 %v936, %v936
        %v938 = vld [vmem:[%s8] sm:$0xf]
        %v939 = vld [vmem:[%s8 + $0x4] sm:$0xf]
        %v940 = vld [vmem:[%s8 + $0x8] sm:$0xf]
        %v941 = vld [vmem:[%s8 + $0xc] sm:$0xf]
        %v942 = vld [vmem:[%s9] sm:$0x1]
        %v944 = vperm.slane %v942, 0
        %v950 = vunpack.c.l.b16 %v938
        %v951 = vunpack.c.l.b16 %v939
        %v952 = vunpack.c.l.b16 %v940
        %v953 = vunpack.c.l.b16 %v941
        %v954 = vpack.c.b16 %v951, %v950
        %v955 = vpack.c.b16 %v953, %v952
        %v959 = vsel %vm550, %v937, 0
        %961 = vmatpush.bf16.msra.mxu0 0
        %962 = vmatpush.bf16.msra.mxu0 0
        %963 = vmatpush.bf16.msra.mxu0 0
        %964 = vmatpush.bf16.msra.mxu0 0
        %965 = vmatpush.bf16.msra.mxu0 0
        %966 = vmatpush.bf16.msra.mxu0 0
        %967 = vmatpush.bf16.msra.mxu0 %v955
        %968 = vmatpush.bf16.msra.mxu0 %v954
        %969 = vmatmul.bf16.gmra.mxu0 %v959
        %v970 = vpop.f32.mrf.mxu0
        %v971 = vadd.f32 %v944, %v970
        %v972 = vpop.f32.mrf.mxu0
        %973 = vdwg.mxu0
        %v974 = vmax.f32 %v971, 0.0
        %v975 = vpack.c.bf16 %v974, %v974
        %v976 = vld [vmem:[%s10] sm:$0xf]
        %v977 = vld [vmem:[%s10 + $0x4] sm:$0xf]
        %v978 = vld [vmem:[%s10 + $0x8] sm:$0xf]
        %v979 = vld [vmem:[%s10 + $0xc] sm:$0xf]
        %v980 = vld [vmem:[%s10 + $0x10] sm:$0xf]
        %v981 = vld [vmem:[%s10 + $0x14] sm:$0xf]
        %v982 = vld [vmem:[%s10 + $0x18] sm:$0xf]
        %v983 = vld [vmem:[%s10 + $0x1c] sm:$0xf]
        %v984 = vld [vmem:[%s10 + $0x20] sm:$0xf]
        %v985 = vld [vmem:[%s10 + $0x24] sm:$0xf]
        %v986 = vld [vmem:[%s10 + $0x28] sm:$0xf]
        %v987 = vld [vmem:[%s10 + $0x2c] sm:$0xf]
        %v988 = vld [vmem:[%s10 + $0x30] sm:$0xf]
        %v989 = vld [vmem:[%s10 + $0x34] sm:$0xf]
        %v990 = vld [vmem:[%s10 + $0x38] sm:$0xf]
        %v991 = vld [vmem:[%s10 + $0x3c] sm:$0xf]
        %v992 = vld [vmem:[%s11] sm:$0x1]
        %v994 = vperm.slane %v992, 0
        %v1012 = vunpack.c.l.b16 %v976
        %v1013 = vunpack.c.l.b16 %v977
        %v1014 = vunpack.c.l.b16 %v978
        %v1015 = vunpack.c.l.b16 %v979
        %v1016 = vunpack.c.l.b16 %v980
        %v1017 = vunpack.c.l.b16 %v981
        %v1018 = vunpack.c.l.b16 %v982
        %v1019 = vunpack.c.l.b16 %v983
        %v1020 = vunpack.c.l.b16 %v984
        %v1021 = vunpack.c.l.b16 %v985
        %v1022 = vunpack.c.l.b16 %v986
        %v1023 = vunpack.c.l.b16 %v987
        %v1024 = vunpack.c.l.b16 %v988
        %v1025 = vunpack.c.l.b16 %v989
        %v1026 = vunpack.c.l.b16 %v990
        %v1027 = vunpack.c.l.b16 %v991
        %v1028 = vpack.c.b16 %v1013, %v1012
        %v1029 = vpack.c.b16 %v1015, %v1014
        %v1030 = vpack.c.b16 %v1017, %v1016
        %v1031 = vpack.c.b16 %v1019, %v1018
        %v1032 = vpack.c.b16 %v1021, %v1020
        %v1033 = vpack.c.b16 %v1023, %v1022
        %v1034 = vpack.c.b16 %v1025, %v1024
        %v1035 = vpack.c.b16 %v1027, %v1026
        %1044 = vmatpush.bf16.msra.mxu0 %v1035
        %1045 = vmatpush.bf16.msra.mxu0 %v1034
        %1046 = vmatpush.bf16.msra.mxu0 %v1033
        %1047 = vmatpush.bf16.msra.mxu0 %v1032
        %1048 = vmatpush.bf16.msra.mxu0 %v1031
        %1049 = vmatpush.bf16.msra.mxu0 %v1030
        %1050 = vmatpush.bf16.msra.mxu0 %v1029
        %1051 = vmatpush.bf16.msra.mxu0 %v1028
        %1052 = vmatmul.bf16.gmra.mxu0 %v975
        %v1053 = vpop.f32.mrf.mxu0
        %v1054 = vadd.f32 %v994, %v1053
        %v1055 = vpop.f32.mrf.mxu0
        %1056 = vdwg.mxu0
        %v1057 = vadd.f32 %v1054, %v936
        %v1058 = vld [vmem:[%s12] sm:$0x1]
        %v1059 = vld [vmem:[%s13] sm:$0x1]
        %v1060 = vsel %vm550, %v1057, 0.0
        %1061 = vadd.xlane.f32.xlu0 %v1060
        %v1062 = vpop.xlane.xlu0 %1061
        %v1063 = vmul.f32 %v1062, %v909
        %v1064 = vsub.f32 %v1057, %v1063
        %v1065 = vmul.f32 %v1064, %v1064
        %v1066 = vsel %vm550, %v1065, 0.0
        %1067 = vadd.xlane.f32.xlu0 %v1066
        %v1068 = vpop.xlane.xlu0 %1067
        %v1069 = vmul.f32 %v1068, %v909
        %v1070 = vadd.f32 %v1069, 1e-05
        %v1071 = vrsqrt.pop %v1070
        %v1072 = vmul.f32 %v1071, %v1070
        %v1073 = vmul.f32 %v1072, %v1071
        %v1074 = vmul.f32 0.5, %v1073
        %v1075 = vsub.f32 1.5, %v1074
        %v1076 = vmul.f32 %v1071, %v1075
        %vm1077 = vweird.f32 %v1070
        %vm1078 = vweird.f32 %v1071
        %vm1079 = vmor %vm1077, %vm1078
        %v1080 = vsel %vm1079, %v1071, %v1076
        %v1081 = vmul.f32 %v1064, %v1080
        %v1083 = vperm.slane %v1058, 0
        %v1085 = vmul.f32 %v1081, %v1083
        %v1087 = vperm.slane %v1059, 0
        %v1089 = vadd.f32 %v1085, %v1087
        %v1090 = vpack.c.bf16 %v1089, %v1089
        %s1091 = scalar_lea.vmem %s3, 16
        %v1092 = vld [vmem:[%s1091] sm:$0xf]
        %v1093 = vld [vmem:[%s1091 + $0x4] sm:$0xf]
        %v1094 = vld [vmem:[%s1091 + $0x8] sm:$0xf]
        %v1095 = vld [vmem:[%s1091 + $0xc] sm:$0xf]
        %v1100 = vunpack.c.l.b16 %v1092
        %v1101 = vunpack.c.l.b16 %v1093
        %v1102 = vunpack.c.l.b16 %v1094
        %v1103 = vunpack.c.l.b16 %v1095
        %v1104 = vpack.c.b16 %v1101, %v1100
        %v1105 = vpack.c.b16 %v1103, %v1102
        %v1109 = vsel %vm550, %v1090, 0
        %1111 = vmatpush.bf16.msra.mxu0 0
        %1112 = vmatpush.bf16.msra.mxu0 0
        %1113 = vmatpush.bf16.msra.mxu0 0
        %1114 = vmatpush.bf16.msra.mxu0 0
        %1115 = vmatpush.bf16.msra.mxu0 0
        %1116 = vmatpush.bf16.msra.mxu0 0
        %1117 = vmatpush.bf16.msra.mxu0 %v1105
        %1118 = vmatpush.bf16.msra.mxu0 %v1104
        %1119 = vmatmul.bf16.gmra.mxu0 %v1109
        %v1120 = vpop.f32.mrf.mxu0
        %v1121 = vadd.f32 0.0, %v1120
        %v1122 = vpop.f32.mrf.mxu0
        %1123 = vdwg.mxu0
        %v1124 = vpack.c.bf16 %v1121, %v1121
        %1126 = vrot.lane.b32.xlu0 %v1124, 120
        %v1127 = vpop.permute.xlu0 %1126
        %1128 = vrot.lane.b32.xlu0 %v1124, 112
        %v1129 = vpop.permute.xlu0 %1128
        %1130 = vrot.lane.b32.xlu0 %v1124, 104
        %v1131 = vpop.permute.xlu0 %1130
        %v1132 = vunpack.c.l.b16 %v1124
        %v1133 = vpack.c.b16 %v1132, %v1132
        %1134 = vrot.lane.b32.xlu0 %v1133, 96
        %v1135 = vpop.permute.xlu0 %1134
        %v1137 = vsel %vm579, %v1124, 0
        %v1140 = vsel %vm579, %v1135, 0
        %1142 = vmatpush.bf16.xpose.msra.mxu0 0
        %1143 = vmatpush.bf16.xpose.msra.mxu0 0
        %1144 = vmatpush.bf16.xpose.msra.mxu0 0
        %1145 = vmatpush.bf16.xpose.msra.mxu0 0
        %1146 = vmatpush.bf16.xpose.msra.mxu0 0
        %1147 = vmatpush.bf16.xpose.msra.mxu0 0
        %1148 = vmatpush.bf16.xpose.msra.mxu0 0
        %1149 = vmatpush.bf16.xpose.msra.mxu0 %v1140
        %1150 = vmatmul.bf16.gmra.mxu0 %v1137
        %v1151 = vpop.f32.mrf.mxu0
        %v1152 = vadd.f32 %v532, %v1151
        %v1153 = vpop.f32.mrf.mxu0
        %1154 = vdwg.mxu0
        %v1155 = vunpack.c.l.b16 %v1127
        %v1156 = vpack.c.b16 %v1155, %v1155
        %1157 = vrot.lane.b32.xlu0 %v1156, 96
        %v1158 = vpop.permute.xlu0 %1157
        %v1160 = vsel %vm579, %v1127, 0
        %v1163 = vsel %vm579, %v1158, 0
        %1165 = vmatpush.bf16.xpose.msra.mxu0 0
        %1166 = vmatpush.bf16.xpose.msra.mxu0 0
        %1167 = vmatpush.bf16.xpose.msra.mxu0 0
        %1168 = vmatpush.bf16.xpose.msra.mxu0 0
        %1169 = vmatpush.bf16.xpose.msra.mxu0 0
        %1170 = vmatpush.bf16.xpose.msra.mxu0 0
        %1171 = vmatpush.bf16.xpose.msra.mxu0 0
        %1172 = vmatpush.bf16.xpose.msra.mxu0 %v1163
        %1173 = vmatmul.bf16.gmra.mxu0 %v1160
        %v1174 = vpop.f32.mrf.mxu0
        %v1175 = vadd.f32 %v532, %v1174
        %v1176 = vpop.f32.mrf.mxu0
        %1177 = vdwg.mxu0
        %v1178 = vunpack.c.l.b16 %v1129
        %v1179 = vpack.c.b16 %v1178, %v1178
        %1180 = vrot.lane.b32.xlu0 %v1179, 96
        %v1181 = vpop.permute.xlu0 %1180
        %v1183 = vsel %vm579, %v1129, 0
        %v1186 = vsel %vm579, %v1181, 0
        %1188 = vmatpush.bf16.xpose.msra.mxu0 0
        %1189 = vmatpush.bf16.xpose.msra.mxu0 0
        %1190 = vmatpush.bf16.xpose.msra.mxu0 0
        %1191 = vmatpush.bf16.xpose.msra.mxu0 0
        %1192 = vmatpush.bf16.xpose.msra.mxu0 0
        %1193 = vmatpush.bf16.xpose.msra.mxu0 0
        %1194 = vmatpush.bf16.xpose.msra.mxu0 0
        %1195 = vmatpush.bf16.xpose.msra.mxu0 %v1186
        %1196 = vmatmul.bf16.gmra.mxu0 %v1183
        %v1197 = vpop.f32.mrf.mxu0
        %v1198 = vadd.f32 %v532, %v1197
        %v1199 = vpop.f32.mrf.mxu0
        %1200 = vdwg.mxu0
        %v1201 = vunpack.c.l.b16 %v1131
        %v1202 = vpack.c.b16 %v1201, %v1201
        %1203 = vrot.lane.b32.xlu0 %v1202, 96
        %v1204 = vpop.permute.xlu0 %1203
        %v1206 = vsel %vm579, %v1131, 0
        %v1209 = vsel %vm579, %v1204, 0
        %1211 = vmatpush.bf16.xpose.msra.mxu0 0
        %1212 = vmatpush.bf16.xpose.msra.mxu0 0
        %1213 = vmatpush.bf16.xpose.msra.mxu0 0
        %1214 = vmatpush.bf16.xpose.msra.mxu0 0
        %1215 = vmatpush.bf16.xpose.msra.mxu0 0
        %1216 = vmatpush.bf16.xpose.msra.mxu0 0
        %1217 = vmatpush.bf16.xpose.msra.mxu0 0
        %1218 = vmatpush.bf16.xpose.msra.mxu0 %v1209
        %1219 = vmatmul.bf16.gmra.mxu0 %v1206
        %v1220 = vpop.f32.mrf.mxu0
        %v1221 = vadd.f32 %v532, %v1220
        %v1222 = vpop.f32.mrf.mxu0
        %1223 = vdwg.mxu0
        %v1224 = vsel %vm579, %v1152, -inf
        %1225 = vmax.xlane.f32.xlu0 %v1224
        %v1226 = vpop.xlane.xlu0 %1225
        %v1227 = vsel %vm579, %v1175, -inf
        %1228 = vmax.xlane.f32.xlu0 %v1227
        %v1229 = vpop.xlane.xlu0 %1228
        %v1230 = vsel %vm579, %v1198, -inf
        %1231 = vmax.xlane.f32.xlu0 %v1230
        %v1232 = vpop.xlane.xlu0 %1231
        %v1233 = vsel %vm579, %v1221, -inf
        %1234 = vmax.xlane.f32.xlu0 %v1233
        %v1235 = vpop.xlane.xlu0 %1234
        %v1236 = vsub.f32 %v1152, %v1226
        %v1237 = vsub.f32 %v1175, %v1229
        %v1238 = vsub.f32 %v1198, %v1232
        %v1239 = vsub.f32 %v1221, %v1235
        %v1240 = vmul.f32 %v1236, 1.442695
        %v1241 = vpow.pop %v1240
        %v1242 = vmul.f32 %v1237, 1.442695
        %v1243 = vpow.pop %v1242
        %v1244 = vmul.f32 %v1238, 1.442695
        %v1245 = vpow.pop %v1244
        %v1246 = vmul.f32 %v1239, 1.442695
        %v1247 = vpow.pop %v1246
        %v1248 = vsel %vm579, %v1241, 0.0
        %1249 = vadd.xlane.f32.xlu0 %v1248
        %v1250 = vpop.xlane.xlu0 %1249
        %v1251 = vsel %vm579, %v1243, 0.0
        %1252 = vadd.xlane.f32.xlu0 %v1251
        %v1253 = vpop.xlane.xlu0 %1252
        %v1254 = vsel %vm579, %v1245, 0.0
        %1255 = vadd.xlane.f32.xlu0 %v1254
        %v1256 = vpop.xlane.xlu0 %1255
        %v1257 = vsel %vm579, %v1247, 0.0
        %1258 = vadd.xlane.f32.xlu0 %v1257
        %v1259 = vpop.xlane.xlu0 %1258
        %v1260 = vrcp.pop %v1250
        %v1261 = vrcp.pop %v1253
        %v1262 = vrcp.pop %v1256
        %v1263 = vrcp.pop %v1259
        %v1264 = vmul.f32 %v1241, %v1260
        %v1265 = vmul.f32 %v1243, %v1261
        %v1266 = vmul.f32 %v1245, %v1262
        %v1267 = vmul.f32 %v1247, %v1263
        %v1268 = vpack.c.bf16 %v1264, %v1264
        %v1269 = vpack.c.bf16 %v1265, %v1265
        %v1270 = vpack.c.bf16 %v1266, %v1266
        %v1271 = vpack.c.bf16 %v1267, %v1267
        %1272 = vrot.lane.b32.xlu0 %v1133, 64
        %v1273 = vpop.permute.xlu0 %1272
        %v1275 = vsel %vm579, %v1268, 0
        %v1278 = vsel %vm721, %v1273, 0
        %1280 = vmatpush.bf16.msra.mxu0 0
        %1281 = vmatpush.bf16.msra.mxu0 0
        %1282 = vmatpush.bf16.msra.mxu0 0
        %1283 = vmatpush.bf16.msra.mxu0 0
        %1284 = vmatpush.bf16.msra.mxu0 0
        %1285 = vmatpush.bf16.msra.mxu0 0
        %1286 = vmatpush.bf16.msra.mxu0 0
        %1287 = vmatpush.bf16.msra.mxu0 %v1278
        %1288 = vmatmul.bf16.gmra.mxu0 %v1275
        %v1289 = vpop.f32.mrf.mxu0
        %v1290 = vadd.f32 0.0, %v1289
        %v1291 = vpop.f32.mrf.mxu0
        %1292 = vdwg.mxu0
        %1293 = vrot.lane.b32.xlu0 %v1156, 64
        %v1294 = vpop.permute.xlu0 %1293
        %v1296 = vsel %vm579, %v1269, 0
        %v1299 = vsel %vm721, %v1294, 0
        %1301 = vmatpush.bf16.msra.mxu0 0
        %1302 = vmatpush.bf16.msra.mxu0 0
        %1303 = vmatpush.bf16.msra.mxu0 0
        %1304 = vmatpush.bf16.msra.mxu0 0
        %1305 = vmatpush.bf16.msra.mxu0 0
        %1306 = vmatpush.bf16.msra.mxu0 0
        %1307 = vmatpush.bf16.msra.mxu0 0
        %1308 = vmatpush.bf16.msra.mxu0 %v1299
        %1309 = vmatmul.bf16.gmra.mxu0 %v1296
        %v1310 = vpop.f32.mrf.mxu0
        %v1311 = vadd.f32 0.0, %v1310
        %v1312 = vpop.f32.mrf.mxu0
        %1313 = vdwg.mxu0
        %1314 = vrot.lane.b32.xlu0 %v1179, 64
        %v1315 = vpop.permute.xlu0 %1314
        %v1317 = vsel %vm579, %v1270, 0
        %v1320 = vsel %vm721, %v1315, 0
        %1322 = vmatpush.bf16.msra.mxu0 0
        %1323 = vmatpush.bf16.msra.mxu0 0
        %1324 = vmatpush.bf16.msra.mxu0 0
        %1325 = vmatpush.bf16.msra.mxu0 0
        %1326 = vmatpush.bf16.msra.mxu0 0
        %1327 = vmatpush.bf16.msra.mxu0 0
        %1328 = vmatpush.bf16.msra.mxu0 0
        %1329 = vmatpush.bf16.msra.mxu0 %v1320
        %1330 = vmatmul.bf16.gmra.mxu0 %v1317
        %v1331 = vpop.f32.mrf.mxu0
        %v1332 = vadd.f32 0.0, %v1331
        %v1333 = vpop.f32.mrf.mxu0
        %1334 = vdwg.mxu0
        %1335 = vrot.lane.b32.xlu0 %v1202, 64
        %v1336 = vpop.permute.xlu0 %1335
        %v1338 = vsel %vm579, %v1271, 0
        %v1341 = vsel %vm721, %v1336, 0
        %1343 = vmatpush.bf16.msra.mxu0 0
        %1344 = vmatpush.bf16.msra.mxu0 0
        %1345 = vmatpush.bf16.msra.mxu0 0
        %1346 = vmatpush.bf16.msra.mxu0 0
        %1347 = vmatpush.bf16.msra.mxu0 0
        %1348 = vmatpush.bf16.msra.mxu0 0
        %1349 = vmatpush.bf16.msra.mxu0 0
        %1350 = vmatpush.bf16.msra.mxu0 %v1341
        %1351 = vmatmul.bf16.gmra.mxu0 %v1338
        %v1352 = vpop.f32.mrf.mxu0
        %v1353 = vadd.f32 0.0, %v1352
        %v1354 = vpop.f32.mrf.mxu0
        %1355 = vdwg.mxu0
        %v1356 = vpack.c.bf16 %v1290, %v1290
        %v1357 = vpack.c.bf16 %v1311, %v1311
        %v1358 = vpack.c.bf16 %v1332, %v1332
        %v1359 = vpack.c.bf16 %v1353, %v1353
        %s1360 = scalar_lea.vmem %s4, 16
        %v1361 = vld [vmem:[%s1360] sm:$0xf]
        %v1362 = vld [vmem:[%s1360 + $0x4] sm:$0xf]
        %v1363 = vld [vmem:[%s1360 + $0x8] sm:$0xf]
        %v1364 = vld [vmem:[%s1360 + $0xc] sm:$0xf]
        %v1366 = vsel %vm579, %v1356, 0
        %v1369 = vsel %vm721, %v1361, 0
        %1371 = vmatpush.bf16.msra.mxu0 0
        %1372 = vmatpush.bf16.msra.mxu0 0
        %1373 = vmatpush.bf16.msra.mxu0 0
        %1374 = vmatpush.bf16.msra.mxu0 0
        %1375 = vmatpush.bf16.msra.mxu0 0
        %1376 = vmatpush.bf16.msra.mxu0 0
        %1377 = vmatpush.bf16.msra.mxu0 0
        %1378 = vmatpush.bf16.msra.mxu0 %v1369
        %1379 = vmatmul.bf16.gmra.mxu0 %v1366
        %v1380 = vpop.f32.mrf.mxu0
        %v1381 = vadd.f32 0.0, %v1380
        %v1382 = vpop.f32.mrf.mxu0
        %1383 = vdwg.mxu0
        %v1385 = vsel %vm579, %v1357, 0
        %v1388 = vsel %vm721, %v1362, 0
        %1390 = vmatpush.bf16.msra.mxu0 0
        %1391 = vmatpush.bf16.msra.mxu0 0
        %1392 = vmatpush.bf16.msra.mxu0 0
        %1393 = vmatpush.bf16.msra.mxu0 0
        %1394 = vmatpush.bf16.msra.mxu0 0
        %1395 = vmatpush.bf16.msra.mxu0 0
        %1396 = vmatpush.bf16.msra.mxu0 0
        %1397 = vmatpush.bf16.msra.mxu0 %v1388
        %1398 = vmatmul.bf16.gmra.mxu0 %v1385
        %v1399 = vpop.f32.mrf.mxu0
        %v1400 = vadd.f32 0.0, %v1399
        %v1401 = vpop.f32.mrf.mxu0
        %1402 = vdwg.mxu0
        %v1404 = vsel %vm579, %v1358, 0
        %v1407 = vsel %vm721, %v1363, 0
        %1409 = vmatpush.bf16.msra.mxu0 0
        %1410 = vmatpush.bf16.msra.mxu0 0
        %1411 = vmatpush.bf16.msra.mxu0 0
        %1412 = vmatpush.bf16.msra.mxu0 0
        %1413 = vmatpush.bf16.msra.mxu0 0
        %1414 = vmatpush.bf16.msra.mxu0 0
        %1415 = vmatpush.bf16.msra.mxu0 0
        %1416 = vmatpush.bf16.msra.mxu0 %v1407
        %1417 = vmatmul.bf16.gmra.mxu0 %v1404
        %v1418 = vpop.f32.mrf.mxu0
        %v1419 = vadd.f32 0.0, %v1418
        %v1420 = vpop.f32.mrf.mxu0
        %1421 = vdwg.mxu0
        %v1423 = vsel %vm579, %v1359, 0
        %v1426 = vsel %vm721, %v1364, 0
        %1428 = vmatpush.bf16.msra.mxu0 0
        %1429 = vmatpush.bf16.msra.mxu0 0
        %1430 = vmatpush.bf16.msra.mxu0 0
        %1431 = vmatpush.bf16.msra.mxu0 0
        %1432 = vmatpush.bf16.msra.mxu0 0
        %1433 = vmatpush.bf16.msra.mxu0 0
        %1434 = vmatpush.bf16.msra.mxu0 0
        %1435 = vmatpush.bf16.msra.mxu0 %v1426
        %1436 = vmatmul.bf16.gmra.mxu0 %v1423
        %v1437 = vpop.f32.mrf.mxu0
        %v1438 = vadd.f32 0.0, %v1437
        %v1439 = vpop.f32.mrf.mxu0
        %1440 = vdwg.mxu0
        %v1441 = vsel %vm550, %v1381, 0.0
        %v1442 = vsel %vm550, %v1400, 0.0
        %v1443 = vadd.f32 %v1441, %v1442
        %v1444 = vsel %vm550, %v1419, 0.0
        %v1445 = vadd.f32 %v1443, %v1444
        %v1446 = vsel %vm550, %v1438, 0.0
        %v1447 = vadd.f32 %v1445, %v1446
        %s1448 = scalar_lea.vmem %s5, 1
        %v1449 = vld [vmem:[%s1448] sm:$0x1]
        %v1451 = vperm.slane %v1449, 0
        %v1453 = vadd.f32 %v1447, %v1451
        %v1454 = vadd.f32 %v1453, %v1089
        %s1455 = scalar_lea.vmem %s6, 1
        %v1456 = vld [vmem:[%s1455] sm:$0x1]
        %s1457 = scalar_lea.vmem %s7, 1
        %v1458 = vld [vmem:[%s1457] sm:$0x1]
        %v1459 = vsel %vm550, %v1454, 0.0
        %1460 = vadd.xlane.f32.xlu0 %v1459
        %v1461 = vpop.xlane.xlu0 %1460
        %v1462 = vmul.f32 %v1461, %v909
        %v1463 = vsub.f32 %v1454, %v1462
        %v1464 = vmul.f32 %v1463, %v1463
        %v1465 = vsel %vm550, %v1464, 0.0
        %1466 = vadd.xlane.f32.xlu0 %v1465
        %v1467 = vpop.xlane.xlu0 %1466
        %v1468 = vmul.f32 %v1467, %v909
        %v1469 = vadd.f32 %v1468, 1e-05
        %v1470 = vrsqrt.pop %v1469
        %v1471 = vmul.f32 %v1470, %v1469
        %v1472 = vmul.f32 %v1471, %v1470
        %v1473 = vmul.f32 0.5, %v1472
        %v1474 = vsub.f32 1.5, %v1473
        %v1475 = vmul.f32 %v1470, %v1474
        %vm1476 = vweird.f32 %v1469
        %vm1477 = vweird.f32 %v1470
        %vm1478 = vmor %vm1476, %vm1477
        %v1479 = vsel %vm1478, %v1470, %v1475
        %v1480 = vmul.f32 %v1463, %v1479
        %v1482 = vperm.slane %v1456, 0
        %v1484 = vmul.f32 %v1480, %v1482
        %v1486 = vperm.slane %v1458, 0
        %v1488 = vadd.f32 %v1484, %v1486
        %v1489 = vpack.c.bf16 %v1488, %v1488
        %s1490 = scalar_lea.vmem %s8, 16
        %v1491 = vld [vmem:[%s1490] sm:$0xf]
        %v1492 = vld [vmem:[%s1490 + $0x4] sm:$0xf]
        %v1493 = vld [vmem:[%s1490 + $0x8] sm:$0xf]
        %v1494 = vld [vmem:[%s1490 + $0xc] sm:$0xf]
        %s1495 = scalar_lea.vmem %s9, 1
        %v1496 = vld [vmem:[%s1495] sm:$0x1]
        %v1498 = vperm.slane %v1496, 0
        %v1504 = vunpack.c.l.b16 %v1491
        %v1505 = vunpack.c.l.b16 %v1492
        %v1506 = vunpack.c.l.b16 %v1493
        %v1507 = vunpack.c.l.b16 %v1494
        %v1508 = vpack.c.b16 %v1505, %v1504
        %v1509 = vpack.c.b16 %v1507, %v1506
        %v1513 = vsel %vm550, %v1489, 0
        %1515 = vmatpush.bf16.msra.mxu0 0
        %1516 = vmatpush.bf16.msra.mxu0 0
        %1517 = vmatpush.bf16.msra.mxu0 0
        %1518 = vmatpush.bf16.msra.mxu0 0
        %1519 = vmatpush.bf16.msra.mxu0 0
        %1520 = vmatpush.bf16.msra.mxu0 0
        %1521 = vmatpush.bf16.msra.mxu0 %v1509
        %1522 = vmatpush.bf16.msra.mxu0 %v1508
        %1523 = vmatmul.bf16.gmra.mxu0 %v1513
        %v1524 = vpop.f32.mrf.mxu0
        %v1525 = vadd.f32 %v1498, %v1524
        %v1526 = vpop.f32.mrf.mxu0
        %1527 = vdwg.mxu0
        %v1528 = vmax.f32 %v1525, 0.0
        %v1529 = vpack.c.bf16 %v1528, %v1528
        %s1530 = scalar_lea.vmem %s10, 64
        %v1531 = vld [vmem:[%s1530] sm:$0xf]
        %v1532 = vld [vmem:[%s1530 + $0x4] sm:$0xf]
        %v1533 = vld [vmem:[%s1530 + $0x8] sm:$0xf]
        %v1534 = vld [vmem:[%s1530 + $0xc] sm:$0xf]
        %v1535 = vld [vmem:[%s1530 + $0x10] sm:$0xf]
        %v1536 = vld [vmem:[%s1530 + $0x14] sm:$0xf]
        %v1537 = vld [vmem:[%s1530 + $0x18] sm:$0xf]
        %v1538 = vld [vmem:[%s1530 + $0x1c] sm:$0xf]
        %v1539 = vld [vmem:[%s1530 + $0x20] sm:$0xf]
        %v1540 = vld [vmem:[%s1530 + $0x24] sm:$0xf]
        %v1541 = vld [vmem:[%s1530 + $0x28] sm:$0xf]
        %v1542 = vld [vmem:[%s1530 + $0x2c] sm:$0xf]
        %v1543 = vld [vmem:[%s1530 + $0x30] sm:$0xf]
        %v1544 = vld [vmem:[%s1530 + $0x34] sm:$0xf]
        %v1545 = vld [vmem:[%s1530 + $0x38] sm:$0xf]
        %v1546 = vld [vmem:[%s1530 + $0x3c] sm:$0xf]
        %s1547 = scalar_lea.vmem %s11, 1
        %v1548 = vld [vmem:[%s1547] sm:$0x1]
        %v1550 = vperm.slane %v1548, 0
        %v1568 = vunpack.c.l.b16 %v1531
        %v1569 = vunpack.c.l.b16 %v1532
        %v1570 = vunpack.c.l.b16 %v1533
        %v1571 = vunpack.c.l.b16 %v1534
        %v1572 = vunpack.c.l.b16 %v1535
        %v1573 = vunpack.c.l.b16 %v1536
        %v1574 = vunpack.c.l.b16 %v1537
        %v1575 = vunpack.c.l.b16 %v1538
        %v1576 = vunpack.c.l.b16 %v1539
        %v1577 = vunpack.c.l.b16 %v1540
        %v1578 = vunpack.c.l.b16 %v1541
        %v1579 = vunpack.c.l.b16 %v1542
        %v1580 = vunpack.c.l.b16 %v1543
        %v1581 = vunpack.c.l.b16 %v1544
        %v1582 = vunpack.c.l.b16 %v1545
        %v1583 = vunpack.c.l.b16 %v1546
        %v1584 = vpack.c.b16 %v1569, %v1568
        %v1585 = vpack.c.b16 %v1571, %v1570
        %v1586 = vpack.c.b16 %v1573, %v1572
        %v1587 = vpack.c.b16 %v1575, %v1574
        %v1588 = vpack.c.b16 %v1577, %v1576
        %v1589 = vpack.c.b16 %v1579, %v1578
        %v1590 = vpack.c.b16 %v1581, %v1580
        %v1591 = vpack.c.b16 %v1583, %v1582
        %1600 = vmatpush.bf16.msra.mxu0 %v1591
        %1601 = vmatpush.bf16.msra.mxu0 %v1590
        %1602 = vmatpush.bf16.msra.mxu0 %v1589
        %1603 = vmatpush.bf16.msra.mxu0 %v1588
        %1604 = vmatpush.bf16.msra.mxu0 %v1587
        %1605 = vmatpush.bf16.msra.mxu0 %v1586
        %1606 = vmatpush.bf16.msra.mxu0 %v1585
        %1607 = vmatpush.bf16.msra.mxu0 %v1584
        %1608 = vmatmul.bf16.gmra.mxu0 %v1529
        %v1609 = vpop.f32.mrf.mxu0
        %v1610 = vadd.f32 %v1550, %v1609
        %v1611 = vpop.f32.mrf.mxu0
        %1612 = vdwg.mxu0
        %v1613 = vadd.f32 %v1610, %v1488
        %s1614 = scalar_lea.vmem %s12, 1
        %v1615 = vld [vmem:[%s1614] sm:$0x1]
        %s1616 = scalar_lea.vmem %s13, 1
        %v1617 = vld [vmem:[%s1616] sm:$0x1]
        %v1618 = vsel %vm550, %v1613, 0.0
        %1619 = vadd.xlane.f32.xlu0 %v1618
        %v1620 = vpop.xlane.xlu0 %1619
        %v1621 = vmul.f32 %v1620, %v909
        %v1622 = vsub.f32 %v1613, %v1621
        %v1623 = vmul.f32 %v1622, %v1622
        %v1624 = vsel %vm550, %v1623, 0.0
        %1625 = vadd.xlane.f32.xlu0 %v1624
        %v1626 = vpop.xlane.xlu0 %1625
        %v1627 = vmul.f32 %v1626, %v909
        %v1628 = vadd.f32 %v1627, 1e-05
        %v1629 = vrsqrt.pop %v1628
        %v1630 = vmul.f32 %v1629, %v1628
        %v1631 = vmul.f32 %v1630, %v1629
        %v1632 = vmul.f32 0.5, %v1631
        %v1633 = vsub.f32 1.5, %v1632
        %v1634 = vmul.f32 %v1629, %v1633
        %vm1635 = vweird.f32 %v1628
        %vm1636 = vweird.f32 %v1629
        %vm1637 = vmor %vm1635, %vm1636
        %v1638 = vsel %vm1637, %v1629, %v1634
        %v1639 = vmul.f32 %v1622, %v1638
        %v1641 = vperm.slane %v1615, 0
        %v1643 = vmul.f32 %v1639, %v1641
        %v1645 = vperm.slane %v1617, 0
        %v1647 = vadd.f32 %v1643, %v1645
        %v1648 = vpack.c.bf16 %v1647, %v1647
        %v1649 = vld [vmem:[%s14] sm:$0xf]
        %v1650 = vld [vmem:[%s14 + $0x4] sm:$0xf]
        %v1651 = vld [vmem:[%s14 + $0x8] sm:$0xf]
        %v1652 = vld [vmem:[%s14 + $0xc] sm:$0xf]
        %v1653 = vld [vmem:[%s15] sm:$0x1]
        %v1655 = vperm.slane %v1653, 0
        %v1661 = vunpack.c.l.b16 %v1649
        %v1662 = vunpack.c.l.b16 %v1650
        %v1663 = vunpack.c.l.b16 %v1651
        %v1664 = vunpack.c.l.b16 %v1652
        %v1665 = vpack.c.b16 %v1662, %v1661
        %v1666 = vpack.c.b16 %v1664, %v1663
        %v1670 = vsel %vm550, %v1648, 0
        %1672 = vmatpush.bf16.msra.mxu0 0
        %1673 = vmatpush.bf16.msra.mxu0 0
        %1674 = vmatpush.bf16.msra.mxu0 0
        %1675 = vmatpush.bf16.msra.mxu0 0
        %1676 = vmatpush.bf16.msra.mxu0 0
        %1677 = vmatpush.bf16.msra.mxu0 0
        %1678 = vmatpush.bf16.msra.mxu0 %v1666
        %1679 = vmatpush.bf16.msra.mxu0 %v1665
        %1680 = vmatmul.bf16.gmra.mxu0 %v1670
        %v1681 = vpop.f32.mrf.mxu0
        %v1682 = vadd.f32 %v1655, %v1681
        %v1683 = vpop.f32.mrf.mxu0
        %1684 = vdwg.mxu0
        %1685 = vmax.xlane.f32.xlu0 %v1682
        %v1686 = vpop.xlane.xlu0 %1685
        %v1687 = vsub.f32 %v1682, %v1686
        %v1688 = vmul.f32 %v1687, 1.442695
        %v1689 = vpow.pop %v1688
        %1690 = vadd.xlane.f32.xlu0 %v1689
        %v1691 = vpop.xlane.xlu0 %1690
        %v1692 = vlog2.pop %v1691
        %v1693 = vmul.f32 %v1692, 0.6931472
        %v1694 = vsub.f32 %v1687, %v1693
        %1695 = vst [vmem:[%s481] sm:$0xff] %v1694
        %s1696 = sand.u32 %s361, 1
        %s1697 = scalar_lea.sflag [#allocation6], %s1696
        %s1698 = sand.u32 %s361, 1
        %s1699 = smul.addr %s1698, 8
        %s1700 = scalar_lea.vmem [#allocation5], %s1699
        // Predicated region
        $region81: #{tpu_custom_call.1} parent=79 // pred_check
          %p1701 = pneg %p371
        $region82: #{tpu_custom_call.1} parent=79 // pred_check_branch
          %1703 = sbr.rel (%p1701) target = $region84
        $region83: #{tpu_custom_call.1} parent=79 // pred_region
          %1705 = vsyncadd %s1697, 0
          %s1706 = smul.addr %s38, 8
          %s1707 = scalar_lea.hbm %s16, %s1706
          %s1709 = sshll.u32 %s1700, 4
          %s1710 = int_to_ptr.vmem [resolvable:$true] %s1709
          %s1711 = sshll.u32 %s1707, 4
          %s1712 = int_to_ptr.hbm [resolvable:$true] %s1711
          %1714 = dma.vmem_to_hbm [thread:$0]  %s1710, 128, %s1712, %s1697
        $region84: #{tpu_custom_call.1} parent=79 // pred_fallthru
          _
      $region80: #{tpu_custom_call.1} parent=5 // pred_fallthru
        _
      %p1715 = scmp.le.s32.totalorder 2, %s33
      // Predicated region
      $region85: #{tpu_custom_call.1} parent=5 // pred_check
        %p1716 = pneg %p1715
      $region86: #{tpu_custom_call.1} parent=5 // pred_check_branch
        %1718 = sbr.rel (%p1716) target = $region88
      $region87: #{tpu_custom_call.1} parent=5 // pred_region
        %s1719 = ssub.s32 %s33, 2
        // Predicated region
        $region89: #{tpu_custom_call.1} parent=87 // pred_check
          %p1720 = pneg %p377
        $region90: #{tpu_custom_call.1} parent=87 // pred_check_branch
          %1722 = sbr.rel (%p1720) target = $region92
        $region91: #{tpu_custom_call.1} parent=87 // pred_region
          %s1723 = sand.u32 %s362, 1
          %s1724 = scalar_lea.sflag [#allocation6], %s1723
          %s1725 = sand.u32 %s362, 1
          %s1726 = smul.addr %s1725, 8
          %s1727 = scalar_lea.vmem [#allocation5], %s1726
          %1729 = dma.done %s1724, 128
        $region92: #{tpu_custom_call.1} parent=87 // pred_fallthru
          _
      $region88: #{tpu_custom_call.1} parent=5 // pred_fallthru
        _
    $region6: #{tpu_custom_call.1} parent=1 // loop_footer
      %s37 = sadd.s32 1, %s33
    $region7: #{tpu_custom_call.1} parent=1 // loop_footer_branch
      %32 = sbr.rel target = $region3
    $region8: #{tpu_custom_call.1} parent=1 // loop_exit
      _
    %1730 = vsyncpa [#allocation6], 1
    %s1731 = scalar_lea.sflag [#allocation6], 1
    %1732 = vsyncpa %s1731, 1

</llo_original>
